<compile_context>
chip_gen: v7x
topology: tpu7x:2x2x1
jax: 0.10.0
libtpu: 0.0.40
codegen_flags: <defaults>
</compile_context>

<pallas_src>
import functools

import jax
import jax.numpy as jnp
from jax.experimental import pallas as pl
from jax.experimental.pallas import tpu as pltpu


# ----------------------------------------------------------------------------
# Kernel
# ----------------------------------------------------------------------------
def _coordatt_kernel(x_ref, s_ref, t_ref, w1_ref, b1_ref, wh_ref, bh_ref,
                     ww_ref, bw_ref, o_ref, *, height, width):
    inv_w = 1.0 / width
    inv_h = 1.0 / height

    x = x_ref[...]                    # (nb*C, H*W), native dtype (no f32 upcast)
    s = s_ref[...]                    # (H*W, H) one-hot: flat index -> row (h)
    t = t_ref[...]                    # (H*W, W) one-hot: flat index -> col (w)

    # Packed adaptive average pools: all nb*C rows in one MXU matmul each.
    pooled_h = jnp.dot(x, s, preferred_element_type=jnp.float32) * inv_w   # (nb*C, H)
    pooled_w = jnp.dot(x, t, preferred_element_type=jnp.float32) * inv_h   # (nb*C, W)

    w1 = w1_ref[...]                  # (nb*mip, nb*C) block-diag, BN folded in
    b1 = b1_ref[...]                  # (nb*mip, 1)

    def squeeze(p):                   # conv1 (+ folded BN affine) + h_swish
        y = jnp.dot(w1, p, preferred_element_type=jnp.float32) + b1
        return y * (jnp.clip(y + 3.0, 0.0, 6.0) * (1.0 / 6.0))

    a_h = jax.nn.sigmoid(
        jnp.dot(wh_ref[...], squeeze(pooled_h),
                preferred_element_type=jnp.float32) + bh_ref[...])          # (nb*C, H)
    a_w = jax.nn.sigmoid(
        jnp.dot(ww_ref[...], squeeze(pooled_w),
                preferred_element_type=jnp.float32) + bw_ref[...])          # (nb*C, W)

    # Broadcast the gates back to the flat (nb*C, H*W) lane layout with the
    # transposed one-hot selectors (exact).  Sequence the multiplies so only
    # one full-size f32 gate is live at a time.
    g_h = jax.lax.dot_general(a_h, s, (((1,), (1,)), ((), ())),
                              preferred_element_type=jnp.float32)           # (nb*C, H*W)
    xh = x * g_h.astype(x.dtype)
    g_w = jax.lax.dot_general(a_w, t, (((1,), (1,)), ((), ())),
                              preferred_element_type=jnp.float32)           # (nb*C, H*W)
    o_ref[...] = (xh * g_w.astype(x.dtype)).astype(o_ref.dtype)


# ----------------------------------------------------------------------------
# Host-side helpers
# ----------------------------------------------------------------------------
def _fold_params(p, eps=1e-5):
    """Fold eval-mode BN and the conv1 bias into the conv1 weights."""
    scale = p["gamma"] / jnp.sqrt(p["var"] + eps)                 # (mip,)
    w1f = p["w1"] * scale[:, None]                                # (mip, C)
    b1f = p["b1"] * scale + p["beta"] - p["mean"] * scale         # (mip,)
    return w1f, b1f, p["wh"], p["bh"], p["ww"], p["bw"]


def _vmem_limit_bytes():
    """Scoped-VMEM limit: 3/4 of physical capacity, conservative fallback."""
    try:
        info = pltpu.get_tpu_info()
        cap = int(getattr(info, "vmem_capacity_bytes", 0)) or 64 * 1024 * 1024
    except Exception:
        cap = 64 * 1024 * 1024
    return int(min(cap * 3 // 4, 112 * 1024 * 1024))


def _has_two_tensorcores():
    """v7x-class chips pack 2 TensorCores per chip; v5e/v6e have one."""
    try:
        kind = jax.devices()[0].device_kind.lower()
    except Exception:
        return False
    return ("v7" in kind) or ("7x" in kind)


def _choose_batch_pack(n, c, hw, itemsize, mip, sel_bytes, vmem_limit,
                       target_bytes, two_cores):
    """Batch elements packed per grid step.

    Constraints: nb | N; packed sublane dim nb*C is 8-aligned (or the block
    covers the whole array); double-buffered in/out blocks + one f32 gate temp
    + resident selectors/block-diag weights fit the VMEM budget.  Prefer the
    smallest nb reaching `target_bytes`; only require >= 2 grid steps when the
    chip actually has 2 TensorCores (v7x).
    """
    per_batch = c * hw * itemsize

    def weight_bytes(nb):
        w = (nb * mip) * (nb * c) + 2 * (nb * c) * (nb * mip)
        b = (nb * mip) + 2 * (nb * c)
        return 4 * (w + b)

    def fits(nb):
        blk = nb * per_batch
        f32_gate = nb * c * hw * 4
        need = 4 * blk + blk + f32_gate + sel_bytes + weight_bytes(nb) + (1 << 20)
        return need <= vmem_limit and weight_bytes(nb) <= vmem_limit // 8

    aligned = [d for d in range(1, n + 1)
               if n % d == 0 and ((d * c) % 8 == 0 or d == n)]
    cands = [d for d in aligned if fits(d)]
    if not cands:
        # TODO(synk): H*W-tiled two-phase path for maps that overflow VMEM.
        return aligned[0]

    def pick(cs):
        for d in cs:
            if d * per_batch >= target_bytes:
                return d
        return cs[-1]

    if two_cores and n >= 2:
        multi = [d for d in cands if n // d >= 2]
        if multi:
            return pick(multi)
    return pick(cands)


def coord_att_pallas(x_nchw, params, eps=1e-5):
    """CoordAtt forward. x_nchw: (N, C, H, W); returns (N, C, H, W), x's dtype."""
    N, C, H, W = x_nchw.shape
    w1f, b1f, whf, bhf, wwf, bwf = _fold_params(params, eps)
    mip = w1f.shape[0]
    oup = whf.shape[0]
    assert oup == C, "identity * a_w * a_h broadcast requires oup == C"

    hw = H * W
    itemsize = jnp.dtype(x_nchw.dtype).itemsize
    # Free reshape (same contiguous NCHW layout): dense 2-D slab, so blocks
    # never pad the sublane dim when C % 8 != 0.
    x_flat = x_nchw.reshape(N * C, hw)

    # One-hot selectors: S[f, h] = [f // W == h], T[f, w] = [f % W == w].
    # Match x's dtype for 16-bit inputs (halves VMEM/HBM, values exact); keep
    # f32 for f32 inputs so the pooling precision meets the tight tolerance.
    sel_dtype = x_nchw.dtype if itemsize <= 2 else jnp.float32
    f_idx = jnp.arange(hw, dtype=jnp.int32)
    s_sel = (f_idx[:, None] // W ==
             jnp.arange(H, dtype=jnp.int32)[None, :]).astype(sel_dtype)    # (HW, H)
    t_sel = (f_idx[:, None] % W ==
             jnp.arange(W, dtype=jnp.int32)[None, :]).astype(sel_dtype)    # (HW, W)
    sel_bytes = (s_sel.size + t_sel.size) * jnp.dtype(sel_dtype).itemsize

    vmem_limit = _vmem_limit_bytes()
    two_cores = _has_two_tensorcores()
    target_bytes = (8 if two_cores else 4) * 1024 * 1024
    nb = _choose_batch_pack(N, C, hw, itemsize, mip, sel_bytes, vmem_limit,
                            target_bytes, two_cores)
    grid = (N // nb,)
    m_blk = nb * C

    # Block-diagonal mip-stage weights: one plain 2-D matmul per stage covers
    # the whole packed batch (no in-kernel reshapes or per-batch loops).
    eye = jnp.eye(nb, dtype=jnp.float32)
    w1_blk = jnp.kron(eye, w1f)                       # (nb*mip, nb*C)
    wh_blk = jnp.kron(eye, whf)                       # (nb*C, nb*mip)
    ww_blk = jnp.kron(eye, wwf)                       # (nb*C, nb*mip)
    b1_t = jnp.tile(b1f, nb)[:, None]                 # (nb*mip, 1)
    bh_t = jnp.tile(bhf, nb)[:, None]                 # (nb*C, 1)
    bw_t = jnp.tile(bwf, nb)[:, None]                 # (nb*C, 1)

    consts = (s_sel, t_sel, w1_blk, b1_t, wh_blk, bh_t, ww_blk, bw_t)
    kernel = functools.partial(_coordatt_kernel, height=H, width=W)
    data_spec = pl.BlockSpec((m_blk, hw), lambda i: (i, 0))

    def run(single_buffer_consts):
        def const_spec(arr):
            kwargs = {}
            if single_buffer_consts:
                # Constant index map => fetched once; single-buffering frees
                # the never-used second VMEM copy for bigger data blocks.
                kwargs["pipeline_mode"] = pl.Buffered(1)
            return pl.BlockSpec(arr.shape, lambda i: (0, 0), **kwargs)

        grid_spec = pltpu.PrefetchScalarGridSpec(
            num_scalar_prefetch=0,
            grid=grid,
            in_specs=[data_spec] + [const_spec(a) for a in consts],
            out_specs=data_spec,
        )
        return pl.pallas_call(
            kernel,
            out_shape=jax.ShapeDtypeStruct((N * C, hw), x_nchw.dtype),
            grid_spec=grid_spec,
            compiler_params=pltpu.CompilerParams(
                dimension_semantics=("parallel",),
                vmem_limit_bytes=vmem_limit),
        )(x_flat, *consts)

    try:
        out_flat = run(True)
    except Exception:
        # pipeline_mode / Buffered(1) not supported by this JAX version.
        out_flat = run(False)

    return out_flat.reshape(N, C, H, W)


# ----------------------------------------------------------------------------
# Raw (PyTorch-layout) parameters + pure-JAX reference
# ----------------------------------------------------------------------------
def make_params(key, inp, oup, reduction=32):
    mip = max(8, inp // reduction)
    ks = jax.random.split(key, 10)
    return dict(
        w1=jax.random.normal(ks[0], (mip, inp), jnp.float32) * 0.1,   # conv1.weight
        b1=jax.random.normal(ks[1], (mip,), jnp.float32) * 0.1,       # conv1.bias
        wh=jax.random.normal(ks[2], (oup, mip), jnp.float32) * 0.1,   # conv_h.weight
        bh=jax.random.normal(ks[3], (oup,), jnp.float32) * 0.1,
        ww=jax.random.normal(ks[4], (oup, mip), jnp.float32) * 0.1,   # conv_w.weight
        bw=jax.random.normal(ks[5], (oup,), jnp.float32) * 0.1,
        # BatchNorm2d(mip) eval-mode running stats / affine (non-trivial).
        gamma=1.0 + 0.1 * jax.random.normal(ks[6], (mip,), jnp.float32),
        beta=0.1 * jax.random.normal(ks[7], (mip,), jnp.float32),
        mean=0.1 * jax.random.normal(ks[8], (mip,), jnp.float32),
        var=jax.random.uniform(ks[9], (mip,), jnp.float32, minval=0.5, maxval=1.5),
    )


def coord_att_reference(x, p, eps=1e-5):
    """Pure-JAX NCHW reference matching the PyTorch forward (eval-mode BN)."""
    N, C, H, W = x.shape
    x_h = jnp.mean(x, axis=3)                                     # (N, C, H)
    x_w = jnp.mean(x, axis=2)                                     # (N, C, W)
    y = jnp.concatenate([x_h, x_w], axis=2)                       # (N, C, H+W)
    y = jnp.einsum("mc,ncp->nmp", p["w1"], y) + p["b1"][None, :, None]
    scale = p["gamma"] / jnp.sqrt(p["var"] + eps)
    shift = p["beta"] - p["mean"] * scale
    y = y * scale[None, :, None] + shift[None, :, None]
    y = y * (jnp.clip(y + 3.0, 0.0, 6.0) / 6.0)                   # h_swish
    y_h, y_w = y[:, :, :H], y[:, :, H:]
    a_h = jax.nn.sigmoid(jnp.einsum("om,nmh->noh", p["wh"], y_h)
                         + p["bh"][None, :, None])                # (N, C, H)
    a_w = jax.nn.sigmoid(jnp.einsum("om,nmw->now", p["ww"], y_w)
                         + p["bw"][None, :, None])                # (N, C, W)
    return x * a_w[:, :, None, :] * a_h[:, :, :, None]


if __name__ == "__main__":
    N, C, H, W = 2, 4, 16, 16
    key = jax.random.PRNGKey(0)
    k_x, k_p = jax.random.split(key)
    x = jax.random.normal(k_x, (N, C, H, W), jnp.float32)
    params = make_params(k_p, C, C, reduction=32)

    out = jax.block_until_ready(coord_att_pallas(x, params))
    ref = coord_att_reference(x, params)
    assert out.shape == (N, C, H, W)
    max_err = float(jnp.max(jnp.abs(out - ref)))
    assert jnp.allclose(out, ref, atol=2e-5, rtol=2e-5), max_err
    print("KERNEL_OK")
</pallas_src>

<mosaic_0001>
module attributes {stable_mosaic.version = 11 : i64} {
  func.func @_coordatt_kernel(%arg0: i32, %arg1: memref<8x256xf32, #tpu.memory_space<vmem>>, %arg2: memref<256x16xf32, #tpu.memory_space<vmem>>, %arg3: memref<256x16xf32, #tpu.memory_space<vmem>>, %arg4: memref<16x8xf32, #tpu.memory_space<vmem>>, %arg5: memref<16x1xf32, #tpu.memory_space<vmem>>, %arg6: memref<8x16xf32, #tpu.memory_space<vmem>>, %arg7: memref<8x1xf32, #tpu.memory_space<vmem>>, %arg8: memref<8x16xf32, #tpu.memory_space<vmem>>, %arg9: memref<8x1xf32, #tpu.memory_space<vmem>>, %arg10: memref<8x256xf32, #tpu.memory_space<vmem>>) attributes {dimension_semantics = [#tpu.dimension_semantics<parallel>], iteration_bounds = array<i64: 1>, scalar_prefetch = 0 : i64, scratch_operands = 0 : i64, tpu.core_type = #tpu.core_type<tc>, window_params = [{transform_indices = @transform_0, window_bounds = array<i64: 8, 256>}, {pipeline_mode = #tpu.pipeline_mode<synchronous>, transform_indices = @transform_1, window_bounds = array<i64: 256, 16>}, {pipeline_mode = #tpu.pipeline_mode<synchronous>, transform_indices = @transform_2, window_bounds = array<i64: 256, 16>}, {pipeline_mode = #tpu.pipeline_mode<synchronous>, transform_indices = @transform_3, window_bounds = array<i64: 16, 8>}, {pipeline_mode = #tpu.pipeline_mode<synchronous>, transform_indices = @transform_4, window_bounds = array<i64: 16, 1>}, {pipeline_mode = #tpu.pipeline_mode<synchronous>, transform_indices = @transform_5, window_bounds = array<i64: 8, 16>}, {pipeline_mode = #tpu.pipeline_mode<synchronous>, transform_indices = @transform_6, window_bounds = array<i64: 8, 1>}, {pipeline_mode = #tpu.pipeline_mode<synchronous>, transform_indices = @transform_7, window_bounds = array<i64: 8, 16>}, {pipeline_mode = #tpu.pipeline_mode<synchronous>, transform_indices = @transform_8, window_bounds = array<i64: 8, 1>}, {transform_indices = @transform_9, window_bounds = array<i64: 8, 256>}]} {
    %c0 = arith.constant 0 : index
    %c0_0 = arith.constant 0 : index
    %0 = vector.load %arg1[%c0, %c0_0] : memref<8x256xf32, #tpu.memory_space<vmem>>, vector<8x256xf32>
    %c0_1 = arith.constant 0 : index
    %c0_2 = arith.constant 0 : index
    %1 = vector.load %arg2[%c0_1, %c0_2] : memref<256x16xf32, #tpu.memory_space<vmem>>, vector<256x16xf32>
    %c0_3 = arith.constant 0 : index
    %c0_4 = arith.constant 0 : index
    %2 = vector.load %arg3[%c0_3, %c0_4] : memref<256x16xf32, #tpu.memory_space<vmem>>, vector<256x16xf32>
    %cst = arith.constant dense<0.000000e+00> : vector<8x16xf32>
    %3 = tpu.matmul %0, %1, %cst {dimension_numbers = #tpu.dot_dimension_numbers<[1], [0], [0], [1], [0, 0, 1, 1], [], []>} : vector<8x256xf32>, vector<256x16xf32>, vector<8x16xf32> -> vector<8x16xf32>
    %cst_5 = arith.constant 6.250000e-02 : f32
    %4 = vector.broadcast %cst_5 : f32 to vector<8x16xf32>
    %5 = arith.mulf %3, %4 : vector<8x16xf32>
    %cst_6 = arith.constant dense<0.000000e+00> : vector<8x16xf32>
    %6 = tpu.matmul %0, %2, %cst_6 {dimension_numbers = #tpu.dot_dimension_numbers<[1], [0], [0], [1], [0, 0, 1, 1], [], []>} : vector<8x256xf32>, vector<256x16xf32>, vector<8x16xf32> -> vector<8x16xf32>
    %cst_7 = arith.constant 6.250000e-02 : f32
    %7 = vector.broadcast %cst_7 : f32 to vector<8x16xf32>
    %8 = arith.mulf %6, %7 : vector<8x16xf32>
    %c0_8 = arith.constant 0 : index
    %c0_9 = arith.constant 0 : index
    %9 = vector.load %arg4[%c0_8, %c0_9] : memref<16x8xf32, #tpu.memory_space<vmem>>, vector<16x8xf32>
    %c0_10 = arith.constant 0 : index
    %c0_11 = arith.constant 0 : index
    %10 = vector.load %arg5[%c0_10, %c0_11] : memref<16x1xf32, #tpu.memory_space<vmem>>, vector<16x1xf32>
    %c0_12 = arith.constant 0 : index
    %c0_13 = arith.constant 0 : index
    %11 = vector.load %arg6[%c0_12, %c0_13] : memref<8x16xf32, #tpu.memory_space<vmem>>, vector<8x16xf32>
    %cst_14 = arith.constant dense<0.000000e+00> : vector<16x16xf32>
    %12 = tpu.matmul %9, %5, %cst_14 {dimension_numbers = #tpu.dot_dimension_numbers<[1], [0], [0], [1], [0, 0, 1, 1], [], []>} : vector<16x8xf32>, vector<8x16xf32>, vector<16x16xf32> -> vector<16x16xf32>
    %13 = vector.broadcast %10 : vector<16x1xf32> to vector<16x16xf32>
    %14 = arith.addf %12, %13 : vector<16x16xf32>
    %cst_15 = arith.constant 3.000000e+00 : f32
    %15 = vector.broadcast %cst_15 : f32 to vector<16x16xf32>
    %16 = arith.addf %14, %15 : vector<16x16xf32>
    %cst_16 = arith.constant 0.000000e+00 : f32
    %cst_17 = arith.constant 6.000000e+00 : f32
    %17 = vector.broadcast %cst_16 : f32 to vector<16x16xf32>
    %18 = arith.maximumf %17, %16 : vector<16x16xf32>
    %19 = vector.broadcast %cst_17 : f32 to vector<16x16xf32>
    %20 = arith.minimumf %19, %18 : vector<16x16xf32>
    %cst_18 = arith.constant 0.166666672 : f32
    %21 = vector.broadcast %cst_18 : f32 to vector<16x16xf32>
    %22 = arith.mulf %20, %21 : vector<16x16xf32>
    %23 = arith.mulf %14, %22 : vector<16x16xf32>
    %cst_19 = arith.constant dense<0.000000e+00> : vector<8x16xf32>
    %24 = tpu.matmul %11, %23, %cst_19 {dimension_numbers = #tpu.dot_dimension_numbers<[1], [0], [0], [1], [0, 0, 1, 1], [], []>} : vector<8x16xf32>, vector<16x16xf32>, vector<8x16xf32> -> vector<8x16xf32>
    %c0_20 = arith.constant 0 : index
    %c0_21 = arith.constant 0 : index
    %25 = vector.load %arg7[%c0_20, %c0_21] : memref<8x1xf32, #tpu.memory_space<vmem>>, vector<8x1xf32>
    %26 = vector.broadcast %25 : vector<8x1xf32> to vector<8x16xf32>
    %27 = arith.addf %24, %26 : vector<8x16xf32>
    %28 = arith.negf %27 : vector<8x16xf32>
    %29 = math.exp %28 : vector<8x16xf32>
    %cst_22 = arith.constant 1.000000e+00 : f32
    %30 = vector.broadcast %cst_22 : f32 to vector<8x16xf32>
    %31 = arith.addf %30, %29 : vector<8x16xf32>
    %32 = arith.divf %30, %31 : vector<8x16xf32>
    %c0_23 = arith.constant 0 : index
    %c0_24 = arith.constant 0 : index
    %33 = vector.load %arg8[%c0_23, %c0_24] : memref<8x16xf32, #tpu.memory_space<vmem>>, vector<8x16xf32>
    %cst_25 = arith.constant dense<0.000000e+00> : vector<16x16xf32>
    %34 = tpu.matmul %9, %8, %cst_25 {dimension_numbers = #tpu.dot_dimension_numbers<[1], [0], [0], [1], [0, 0, 1, 1], [], []>} : vector<16x8xf32>, vector<8x16xf32>, vector<16x16xf32> -> vector<16x16xf32>
    %35 = vector.broadcast %10 : vector<16x1xf32> to vector<16x16xf32>
    %36 = arith.addf %34, %35 : vector<16x16xf32>
    %cst_26 = arith.constant 3.000000e+00 : f32
    %37 = vector.broadcast %cst_26 : f32 to vector<16x16xf32>
    %38 = arith.addf %36, %37 : vector<16x16xf32>
    %cst_27 = arith.constant 0.000000e+00 : f32
    %cst_28 = arith.constant 6.000000e+00 : f32
    %39 = vector.broadcast %cst_27 : f32 to vector<16x16xf32>
    %40 = arith.maximumf %39, %38 : vector<16x16xf32>
    %41 = vector.broadcast %cst_28 : f32 to vector<16x16xf32>
    %42 = arith.minimumf %41, %40 : vector<16x16xf32>
    %cst_29 = arith.constant 0.166666672 : f32
    %43 = vector.broadcast %cst_29 : f32 to vector<16x16xf32>
    %44 = arith.mulf %42, %43 : vector<16x16xf32>
    %45 = arith.mulf %36, %44 : vector<16x16xf32>
    %cst_30 = arith.constant dense<0.000000e+00> : vector<8x16xf32>
    %46 = tpu.matmul %33, %45, %cst_30 {dimension_numbers = #tpu.dot_dimension_numbers<[1], [0], [0], [1], [0, 0, 1, 1], [], []>} : vector<8x16xf32>, vector<16x16xf32>, vector<8x16xf32> -> vector<8x16xf32>
    %c0_31 = arith.constant 0 : index
    %c0_32 = arith.constant 0 : index
    %47 = vector.load %arg9[%c0_31, %c0_32] : memref<8x1xf32, #tpu.memory_space<vmem>>, vector<8x1xf32>
    %48 = vector.broadcast %47 : vector<8x1xf32> to vector<8x16xf32>
    %49 = arith.addf %46, %48 : vector<8x16xf32>
    %50 = arith.negf %49 : vector<8x16xf32>
    %51 = math.exp %50 : vector<8x16xf32>
    %cst_33 = arith.constant 1.000000e+00 : f32
    %52 = vector.broadcast %cst_33 : f32 to vector<8x16xf32>
    %53 = arith.addf %52, %51 : vector<8x16xf32>
    %54 = arith.divf %52, %53 : vector<8x16xf32>
    %cst_34 = arith.constant dense<0.000000e+00> : vector<8x256xf32>
    %55 = tpu.matmul %32, %1, %cst_34 {dimension_numbers = #tpu.dot_dimension_numbers<[1], [1], [0], [0], [0, 0, 1, 0], [], []>} : vector<8x16xf32>, vector<256x16xf32>, vector<8x256xf32> -> vector<8x256xf32>
    %56 = arith.mulf %0, %55 : vector<8x256xf32>
    %cst_35 = arith.constant dense<0.000000e+00> : vector<8x256xf32>
    %57 = tpu.matmul %54, %2, %cst_35 {dimension_numbers = #tpu.dot_dimension_numbers<[1], [1], [0], [0], [0, 0, 1, 0], [], []>} : vector<8x16xf32>, vector<256x16xf32>, vector<8x256xf32> -> vector<8x256xf32>
    %58 = arith.mulf %56, %57 : vector<8x256xf32>
    %c0_36 = arith.constant 0 : index
    %c0_37 = arith.constant 0 : index
    %59 = vector.load %arg10[%c0_36, %c0_37] : memref<8x256xf32, #tpu.memory_space<vmem>>, vector<8x256xf32>
    tpu.vector_store %arg10[%c0_36, %c0_37], %58 {strides = array<i32>} : memref<8x256xf32, #tpu.memory_space<vmem>>, vector<8x256xf32>,
    return
  }
  func.func @transform_0(%arg0: i32) -> (i32, i32) {
    %c0_i32 = arith.constant 0 : i32
    %c0_i32_0 = arith.constant 0 : i32
    return %arg0, %c0_i32 : i32, i32
  }
  func.func @transform_1(%arg0: i32) -> (i32, i32) {
    %c0_i32 = arith.constant 0 : i32
    %c0_i32_0 = arith.constant 0 : i32
    %c0_i32_1 = arith.constant 0 : i32
    return %c0_i32, %c0_i32_0 : i32, i32
  }
  func.func @transform_2(%arg0: i32) -> (i32, i32) {
    %c0_i32 = arith.constant 0 : i32
    %c0_i32_0 = arith.constant 0 : i32
    %c0_i32_1 = arith.constant 0 : i32
    return %c0_i32, %c0_i32_0 : i32, i32
  }
  func.func @transform_3(%arg0: i32) -> (i32, i32) {
    %c0_i32 = arith.constant 0 : i32
    %c0_i32_0 = arith.constant 0 : i32
    %c0_i32_1 = arith.constant 0 : i32
    return %c0_i32, %c0_i32_0 : i32, i32
  }
  func.func @transform_4(%arg0: i32) -> (i32, i32) {
    %c0_i32 = arith.constant 0 : i32
    %c0_i32_0 = arith.constant 0 : i32
    %c0_i32_1 = arith.constant 0 : i32
    return %c0_i32, %c0_i32_0 : i32, i32
  }
  func.func @transform_5(%arg0: i32) -> (i32, i32) {
    %c0_i32 = arith.constant 0 : i32
    %c0_i32_0 = arith.constant 0 : i32
    %c0_i32_1 = arith.constant 0 : i32
    return %c0_i32, %c0_i32_0 : i32, i32
  }
  func.func @transform_6(%arg0: i32) -> (i32, i32) {
    %c0_i32 = arith.constant 0 : i32
    %c0_i32_0 = arith.constant 0 : i32
    %c0_i32_1 = arith.constant 0 : i32
    return %c0_i32, %c0_i32_0 : i32, i32
  }
  func.func @transform_7(%arg0: i32) -> (i32, i32) {
    %c0_i32 = arith.constant 0 : i32
    %c0_i32_0 = arith.constant 0 : i32
    %c0_i32_1 = arith.constant 0 : i32
    return %c0_i32, %c0_i32_0 : i32, i32
  }
  func.func @transform_8(%arg0: i32) -> (i32, i32) {
    %c0_i32 = arith.constant 0 : i32
    %c0_i32_0 = arith.constant 0 : i32
    %c0_i32_1 = arith.constant 0 : i32
    return %c0_i32, %c0_i32_0 : i32, i32
  }
  func.func @transform_9(%arg0: i32) -> (i32, i32) {
    %c0_i32 = arith.constant 0 : i32
    %c0_i32_0 = arith.constant 0 : i32
    return %arg0, %c0_i32 : i32, i32
  }
}

module attributes {stable_mosaic.version = 11 : i64} {
  func.func @_coordatt_kernel(%arg0: i32, %arg1: memref<8x256xf32, #tpu.memory_space<vmem>>, %arg2: memref<256x16xf32, #tpu.memory_space<vmem>>, %arg3: memref<256x16xf32, #tpu.memory_space<vmem>>, %arg4: memref<16x8xf32, #tpu.memory_space<vmem>>, %arg5: memref<16x1xf32, #tpu.memory_space<vmem>>, %arg6: memref<8x16xf32, #tpu.memory_space<vmem>>, %arg7: memref<8x1xf32, #tpu.memory_space<vmem>>, %arg8: memref<8x16xf32, #tpu.memory_space<vmem>>, %arg9: memref<8x1xf32, #tpu.memory_space<vmem>>, %arg10: memref<8x256xf32, #tpu.memory_space<vmem>>) attributes {dimension_semantics = [#tpu.dimension_semantics<parallel>], iteration_bounds = array<i64: 1>, scalar_prefetch = 0 : i64, scratch_operands = 0 : i64, tpu.core_type = #tpu.core_type<tc>, window_params = [{transform_indices = @transform_0, window_bounds = array<i64: 8, 256>}, {pipeline_mode = #tpu.pipeline_mode<synchronous>, transform_indices = @transform_1, window_bounds = array<i64: 256, 16>}, {pipeline_mode = #tpu.pipeline_mode<synchronous>, transform_indices = @transform_2, window_bounds = array<i64: 256, 16>}, {pipeline_mode = #tpu.pipeline_mode<synchronous>, transform_indices = @transform_3, window_bounds = array<i64: 16, 8>}, {pipeline_mode = #tpu.pipeline_mode<synchronous>, transform_indices = @transform_4, window_bounds = array<i64: 16, 1>}, {pipeline_mode = #tpu.pipeline_mode<synchronous>, transform_indices = @transform_5, window_bounds = array<i64: 8, 16>}, {pipeline_mode = #tpu.pipeline_mode<synchronous>, transform_indices = @transform_6, window_bounds = array<i64: 8, 1>}, {pipeline_mode = #tpu.pipeline_mode<synchronous>, transform_indices = @transform_7, window_bounds = array<i64: 8, 16>}, {pipeline_mode = #tpu.pipeline_mode<synchronous>, transform_indices = @transform_8, window_bounds = array<i64: 8, 1>}, {transform_indices = @transform_9, window_bounds = array<i64: 8, 256>}]} {
    %c0 = arith.constant 0 : index
    %c0_0 = arith.constant 0 : index
    %0 = vector.load %arg1[%c0, %c0_0] : memref<8x256xf32, #tpu.memory_space<vmem>>, vector<8x256xf32>
    %c0_1 = arith.constant 0 : index
    %c0_2 = arith.constant 0 : index
    %1 = vector.load %arg2[%c0_1, %c0_2] : memref<256x16xf32, #tpu.memory_space<vmem>>, vector<256x16xf32>
    %c0_3 = arith.constant 0 : index
    %c0_4 = arith.constant 0 : index
    %2 = vector.load %arg3[%c0_3, %c0_4] : memref<256x16xf32, #tpu.memory_space<vmem>>, vector<256x16xf32>
    %cst = arith.constant dense<0.000000e+00> : vector<8x16xf32>
    %3 = tpu.matmul %0, %1, %cst {dimension_numbers = #tpu.dot_dimension_numbers<[1], [0], [0], [1], [0, 0, 1, 1], [], []>} : vector<8x256xf32>, vector<256x16xf32>, vector<8x16xf32> -> vector<8x16xf32>
    %cst_5 = arith.constant 6.250000e-02 : f32
    %4 = vector.broadcast %cst_5 : f32 to vector<8x16xf32>
    %5 = arith.mulf %3, %4 : vector<8x16xf32>
    %cst_6 = arith.constant dense<0.000000e+00> : vector<8x16xf32>
    %6 = tpu.matmul %0, %2, %cst_6 {dimension_numbers = #tpu.dot_dimension_numbers<[1], [0], [0], [1], [0, 0, 1, 1], [], []>} : vector<8x256xf32>, vector<256x16xf32>, vector<8x16xf32> -> vector<8x16xf32>
    %cst_7 = arith.constant 6.250000e-02 : f32
    %7 = vector.broadcast %cst_7 : f32 to vector<8x16xf32>
    %8 = arith.mulf %6, %7 : vector<8x16xf32>
    %c0_8 = arith.constant 0 : index
    %c0_9 = arith.constant 0 : index
    %9 = vector.load %arg4[%c0_8, %c0_9] : memref<16x8xf32, #tpu.memory_space<vmem>>, vector<16x8xf32>
    %c0_10 = arith.constant 0 : index
    %c0_11 = arith.constant 0 : index
    %10 = vector.load %arg5[%c0_10, %c0_11] : memref<16x1xf32, #tpu.memory_space<vmem>>, vector<16x1xf32>
    %c0_12 = arith.constant 0 : index
    %c0_13 = arith.constant 0 : index
    %11 = vector.load %arg6[%c0_12, %c0_13] : memref<8x16xf32, #tpu.memory_space<vmem>>, vector<8x16xf32>
    %cst_14 = arith.constant dense<0.000000e+00> : vector<16x16xf32>
    %12 = tpu.matmul %9, %5, %cst_14 {dimension_numbers = #tpu.dot_dimension_numbers<[1], [0], [0], [1], [0, 0, 1, 1], [], []>} : vector<16x8xf32>, vector<8x16xf32>, vector<16x16xf32> -> vector<16x16xf32>
    %13 = vector.broadcast %10 : vector<16x1xf32> to vector<16x16xf32>
    %14 = arith.addf %12, %13 : vector<16x16xf32>
    %cst_15 = arith.constant 3.000000e+00 : f32
    %15 = vector.broadcast %cst_15 : f32 to vector<16x16xf32>
    %16 = arith.addf %14, %15 : vector<16x16xf32>
    %cst_16 = arith.constant 0.000000e+00 : f32
    %cst_17 = arith.constant 6.000000e+00 : f32
    %17 = vector.broadcast %cst_16 : f32 to vector<16x16xf32>
    %18 = arith.maximumf %17, %16 : vector<16x16xf32>
    %19 = vector.broadcast %cst_17 : f32 to vector<16x16xf32>
    %20 = arith.minimumf %19, %18 : vector<16x16xf32>
    %cst_18 = arith.constant 0.166666672 : f32
    %21 = vector.broadcast %cst_18 : f32 to vector<16x16xf32>
    %22 = arith.mulf %20, %21 : vector<16x16xf32>
    %23 = arith.mulf %14, %22 : vector<16x16xf32>
    %cst_19 = arith.constant dense<0.000000e+00> : vector<8x16xf32>
    %24 = tpu.matmul %11, %23, %cst_19 {dimension_numbers = #tpu.dot_dimension_numbers<[1], [0], [0], [1], [0, 0, 1, 1], [], []>} : vector<8x16xf32>, vector<16x16xf32>, vector<8x16xf32> -> vector<8x16xf32>
    %c0_20 = arith.constant 0 : index
    %c0_21 = arith.constant 0 : index
    %25 = vector.load %arg7[%c0_20, %c0_21] : memref<8x1xf32, #tpu.memory_space<vmem>>, vector<8x1xf32>
    %26 = vector.broadcast %25 : vector<8x1xf32> to vector<8x16xf32>
    %27 = arith.addf %24, %26 : vector<8x16xf32>
    %28 = arith.negf %27 : vector<8x16xf32>
    %29 = math.exp %28 : vector<8x16xf32>
    %cst_22 = arith.constant 1.000000e+00 : f32
    %30 = vector.broadcast %cst_22 : f32 to vector<8x16xf32>
    %31 = arith.addf %30, %29 : vector<8x16xf32>
    %32 = arith.divf %30, %31 : vector<8x16xf32>
    %c0_23 = arith.constant 0 : index
    %c0_24 = arith.constant 0 : index
    %33 = vector.load %arg8[%c0_23, %c0_24] : memref<8x16xf32, #tpu.memory_space<vmem>>, vector<8x16xf32>
    %cst_25 = arith.constant dense<0.000000e+00> : vector<16x16xf32>
    %34 = tpu.matmul %9, %8, %cst_25 {dimension_numbers = #tpu.dot_dimension_numbers<[1], [0], [0], [1], [0, 0, 1, 1], [], []>} : vector<16x8xf32>, vector<8x16xf32>, vector<16x16xf32> -> vector<16x16xf32>
    %35 = vector.broadcast %10 : vector<16x1xf32> to vector<16x16xf32>
    %36 = arith.addf %34, %35 : vector<16x16xf32>
    %cst_26 = arith.constant 3.000000e+00 : f32
    %37 = vector.broadcast %cst_26 : f32 to vector<16x16xf32>
    %38 = arith.addf %36, %37 : vector<16x16xf32>
    %cst_27 = arith.constant 0.000000e+00 : f32
    %cst_28 = arith.constant 6.000000e+00 : f32
    %39 = vector.broadcast %cst_27 : f32 to vector<16x16xf32>
    %40 = arith.maximumf %39, %38 : vector<16x16xf32>
    %41 = vector.broadcast %cst_28 : f32 to vector<16x16xf32>
    %42 = arith.minimumf %41, %40 : vector<16x16xf32>
    %cst_29 = arith.constant 0.166666672 : f32
    %43 = vector.broadcast %cst_29 : f32 to vector<16x16xf32>
    %44 = arith.mulf %42, %43 : vector<16x16xf32>
    %45 = arith.mulf %36, %44 : vector<16x16xf32>
    %cst_30 = arith.constant dense<0.000000e+00> : vector<8x16xf32>
    %46 = tpu.matmul %33, %45, %cst_30 {dimension_numbers = #tpu.dot_dimension_numbers<[1], [0], [0], [1], [0, 0, 1, 1], [], []>} : vector<8x16xf32>, vector<16x16xf32>, vector<8x16xf32> -> vector<8x16xf32>
    %c0_31 = arith.constant 0 : index
    %c0_32 = arith.constant 0 : index
    %47 = vector.load %arg9[%c0_31, %c0_32] : memref<8x1xf32, #tpu.memory_space<vmem>>, vector<8x1xf32>
    %48 = vector.broadcast %47 : vector<8x1xf32> to vector<8x16xf32>
    %49 = arith.addf %46, %48 : vector<8x16xf32>
    %50 = arith.negf %49 : vector<8x16xf32>
    %51 = math.exp %50 : vector<8x16xf32>
    %cst_33 = arith.constant 1.000000e+00 : f32
    %52 = vector.broadcast %cst_33 : f32 to vector<8x16xf32>
    %53 = arith.addf %52, %51 : vector<8x16xf32>
    %54 = arith.divf %52, %53 : vector<8x16xf32>
    %cst_34 = arith.constant dense<0.000000e+00> : vector<8x256xf32>
    %55 = tpu.matmul %32, %1, %cst_34 {dimension_numbers = #tpu.dot_dimension_numbers<[1], [1], [0], [0], [0, 0, 1, 0], [], []>} : vector<8x16xf32>, vector<256x16xf32>, vector<8x256xf32> -> vector<8x256xf32>
    %56 = arith.mulf %0, %55 : vector<8x256xf32>
    %cst_35 = arith.constant dense<0.000000e+00> : vector<8x256xf32>
    %57 = tpu.matmul %54, %2, %cst_35 {dimension_numbers = #tpu.dot_dimension_numbers<[1], [1], [0], [0], [0, 0, 1, 0], [], []>} : vector<8x16xf32>, vector<256x16xf32>, vector<8x256xf32> -> vector<8x256xf32>
    %58 = arith.mulf %56, %57 : vector<8x256xf32>
    %c0_36 = arith.constant 0 : index
    %c0_37 = arith.constant 0 : index
    %59 = vector.load %arg10[%c0_36, %c0_37] : memref<8x256xf32, #tpu.memory_space<vmem>>, vector<8x256xf32>
    tpu.vector_store %arg10[%c0_36, %c0_37], %58 {strides = array<i32>} : memref<8x256xf32, #tpu.memory_space<vmem>>, vector<8x256xf32>,
    return
  }
  func.func @transform_0(%arg0: i32) -> (i32, i32) {
    %c0_i32 = arith.constant 0 : i32
    %c0_i32_0 = arith.constant 0 : i32
    return %arg0, %c0_i32 : i32, i32
  }
  func.func @transform_1(%arg0: i32) -> (i32, i32) {
    %c0_i32 = arith.constant 0 : i32
    %c0_i32_0 = arith.constant 0 : i32
    %c0_i32_1 = arith.constant 0 : i32
    return %c0_i32, %c0_i32_0 : i32, i32
  }
  func.func @transform_2(%arg0: i32) -> (i32, i32) {
    %c0_i32 = arith.constant 0 : i32
    %c0_i32_0 = arith.constant 0 : i32
    %c0_i32_1 = arith.constant 0 : i32
    return %c0_i32, %c0_i32_0 : i32, i32
  }
  func.func @transform_3(%arg0: i32) -> (i32, i32) {
    %c0_i32 = arith.constant 0 : i32
    %c0_i32_0 = arith.constant 0 : i32
    %c0_i32_1 = arith.constant 0 : i32
    return %c0_i32, %c0_i32_0 : i32, i32
  }
  func.func @transform_4(%arg0: i32) -> (i32, i32) {
    %c0_i32 = arith.constant 0 : i32
    %c0_i32_0 = arith.constant 0 : i32
    %c0_i32_1 = arith.constant 0 : i32
    return %c0_i32, %c0_i32_0 : i32, i32
  }
  func.func @transform_5(%arg0: i32) -> (i32, i32) {
    %c0_i32 = arith.constant 0 : i32
    %c0_i32_0 = arith.constant 0 : i32
    %c0_i32_1 = arith.constant 0 : i32
    return %c0_i32, %c0_i32_0 : i32, i32
  }
  func.func @transform_6(%arg0: i32) -> (i32, i32) {
    %c0_i32 = arith.constant 0 : i32
    %c0_i32_0 = arith.constant 0 : i32
    %c0_i32_1 = arith.constant 0 : i32
    return %c0_i32, %c0_i32_0 : i32, i32
  }
  func.func @transform_7(%arg0: i32) -> (i32, i32) {
    %c0_i32 = arith.constant 0 : i32
    %c0_i32_0 = arith.constant 0 : i32
    %c0_i32_1 = arith.constant 0 : i32
    return %c0_i32, %c0_i32_0 : i32, i32
  }
  func.func @transform_8(%arg0: i32) -> (i32, i32) {
    %c0_i32 = arith.constant 0 : i32
    %c0_i32_0 = arith.constant 0 : i32
    %c0_i32_1 = arith.constant 0 : i32
    return %c0_i32, %c0_i32_0 : i32, i32
  }
  func.func @transform_9(%arg0: i32) -> (i32, i32) {
    %c0_i32 = arith.constant 0 : i32
    %c0_i32_0 = arith.constant 0 : i32
    return %arg0, %c0_i32 : i32, i32
  }
}

</mosaic_0001>

<llo_original>
// kernel: tpu_custom_call.1
$region0: #{tpu_custom_call.1}
  #allocation0 [shape = 'u32[]', space=smem, size = 0x4, offset = 0x4, fixed_abs, tag = 'smem constant byte address 0x4 - core index']
  #allocation1 [shape = 'u32[144,128]{1,0:T(1,128)}', space=vmem, size = 0x12000, scoped, tag = 'internal scratch']
  %s0 = inlined_call_operand.vmem [shape: f32[8,256], index: 0, kind: input, shape index: {}]
  %s1 = inlined_call_operand.vmem [shape: f32[256,16], index: 1, kind: input, shape index: {}]
  %s2 = inlined_call_operand.vmem [shape: f32[256,16], index: 2, kind: input, shape index: {}]
  %s3 = inlined_call_operand.vmem [shape: f32[16,8], index: 3, kind: input, shape index: {}]
  %s4 = inlined_call_operand.vmem [shape: f32[16,1], index: 4, kind: input, shape index: {}]
  %s5 = inlined_call_operand.vmem [shape: f32[8,16], index: 5, kind: input, shape index: {}]
  %s6 = inlined_call_operand.vmem [shape: f32[8,1], index: 6, kind: input, shape index: {}]
  %s7 = inlined_call_operand.vmem [shape: f32[8,16], index: 7, kind: input, shape index: {}]
  %s8 = inlined_call_operand.vmem [shape: f32[8,1], index: 8, kind: input, shape index: {}]
  %s9 = inlined_call_operand.hbm [shape: f32[8,256], index: 9, kind: output, shape index: {}]
  %s10 = sld [smem:[#allocation0]]
  $region46: #{tpu_custom_call.1} parent=0
    _
  %s12 = ssub.s32 1, %s10
  %s13 = scalar_select 0, %s12, %s10
  $region1: #{tpu_custom_call.1} parent=0
    #allocation2 [shape = 'u8[8192]{0}', space=vmem, size = 0x2000, scoped, tag = 'output window, operand 0, single buffered']
    #allocation3 [shape = 's32[1]{0}', space=sflag, size = 0x4, scoped, tag = 'scoped memory for tpu_custom_call.1']
    %14 = vsyncpa [#allocation3], 0
    // Predicated region
    $region2: #{tpu_custom_call.1} parent=1 // pred_check
      _
    $region3: #{tpu_custom_call.1} parent=1 // pred_check_branch
      %16 = sbr.rel (0) target = $region5
    $region4: #{tpu_custom_call.1} parent=1 // pred_region
      _
    $region5: #{tpu_custom_call.1} parent=1 // pred_fallthru
      _
    // Predicated region
    $region6: #{tpu_custom_call.1} parent=1 // pred_check
      _
    $region7: #{tpu_custom_call.1} parent=1 // pred_check_branch
      %18 = sbr.rel (0) target = $region9
    $region8: #{tpu_custom_call.1} parent=1 // pred_region
      _
    $region9: #{tpu_custom_call.1} parent=1 // pred_fallthru
      _
    // Predicated region
    $region10: #{tpu_custom_call.1} parent=1 // pred_check
      _
    $region11: #{tpu_custom_call.1} parent=1 // pred_check_branch
      %20 = sbr.rel (0) target = $region13
    $region12: #{tpu_custom_call.1} parent=1 // pred_region
      _
    $region13: #{tpu_custom_call.1} parent=1 // pred_fallthru
      _
    // Predicated region
    $region14: #{tpu_custom_call.1} parent=1 // pred_check
      _
    $region15: #{tpu_custom_call.1} parent=1 // pred_check_branch
      %22 = sbr.rel (0) target = $region17
    $region16: #{tpu_custom_call.1} parent=1 // pred_region
      _
    $region17: #{tpu_custom_call.1} parent=1 // pred_fallthru
      _
    // Predicated region
    $region18: #{tpu_custom_call.1} parent=1 // pred_check
      _
    $region19: #{tpu_custom_call.1} parent=1 // pred_check_branch
      %24 = sbr.rel (0) target = $region21
    $region20: #{tpu_custom_call.1} parent=1 // pred_region
      _
    $region21: #{tpu_custom_call.1} parent=1 // pred_fallthru
      _
    // Predicated region
    $region22: #{tpu_custom_call.1} parent=1 // pred_check
      _
    $region23: #{tpu_custom_call.1} parent=1 // pred_check_branch
      %26 = sbr.rel (0) target = $region25
    $region24: #{tpu_custom_call.1} parent=1 // pred_region
      _
    $region25: #{tpu_custom_call.1} parent=1 // pred_fallthru
      _
    // Predicated region
    $region26: #{tpu_custom_call.1} parent=1 // pred_check
      _
    $region27: #{tpu_custom_call.1} parent=1 // pred_check_branch
      %28 = sbr.rel (0) target = $region29
    $region28: #{tpu_custom_call.1} parent=1 // pred_region
      _
    $region29: #{tpu_custom_call.1} parent=1 // pred_fallthru
      _
    // Predicated region
    $region30: #{tpu_custom_call.1} parent=1 // pred_check
      _
    $region31: #{tpu_custom_call.1} parent=1 // pred_check_branch
      %30 = sbr.rel (0) target = $region33
    $region32: #{tpu_custom_call.1} parent=1 // pred_region
      _
    $region33: #{tpu_custom_call.1} parent=1 // pred_fallthru
      _
    // Predicated region
    $region34: #{tpu_custom_call.1} parent=1 // pred_check
      _
    $region35: #{tpu_custom_call.1} parent=1 // pred_check_branch
      %32 = sbr.rel (0) target = $region37
    $region36: #{tpu_custom_call.1} parent=1 // pred_region
      _
    $region37: #{tpu_custom_call.1} parent=1 // pred_fallthru
      _
    %v33 = vld [vmem:[%s0] sm:$0xff]
    %v34 = vld [vmem:[%s0 + $0x8] sm:$0xff]
    %v35 = vld [vmem:[%s1] sm:$0xff]
    %v36 = vld [vmem:[%s1 + $0x8] sm:$0xff]
    %v37 = vld [vmem:[%s1 + $0x10] sm:$0xff]
    %v38 = vld [vmem:[%s1 + $0x18] sm:$0xff]
    %v39 = vld [vmem:[%s1 + $0x20] sm:$0xff]
    %v40 = vld [vmem:[%s1 + $0x28] sm:$0xff]
    %v41 = vld [vmem:[%s1 + $0x30] sm:$0xff]
    %v42 = vld [vmem:[%s1 + $0x38] sm:$0xff]
    %v43 = vld [vmem:[%s1 + $0x40] sm:$0xff]
    %v44 = vld [vmem:[%s1 + $0x48] sm:$0xff]
    %v45 = vld [vmem:[%s1 + $0x50] sm:$0xff]
    %v46 = vld [vmem:[%s1 + $0x58] sm:$0xff]
    %v47 = vld [vmem:[%s1 + $0x60] sm:$0xff]
    %v48 = vld [vmem:[%s1 + $0x68] sm:$0xff]
    %v49 = vld [vmem:[%s1 + $0x70] sm:$0xff]
    %v50 = vld [vmem:[%s1 + $0x78] sm:$0xff]
    %v51 = vld [vmem:[%s1 + $0x80] sm:$0xff]
    %v52 = vld [vmem:[%s1 + $0x88] sm:$0xff]
    %v53 = vld [vmem:[%s1 + $0x90] sm:$0xff]
    %v54 = vld [vmem:[%s1 + $0x98] sm:$0xff]
    %v55 = vld [vmem:[%s1 + $0xa0] sm:$0xff]
    %v56 = vld [vmem:[%s1 + $0xa8] sm:$0xff]
    %v57 = vld [vmem:[%s1 + $0xb0] sm:$0xff]
    %v58 = vld [vmem:[%s1 + $0xb8] sm:$0xff]
    %v59 = vld [vmem:[%s1 + $0xc0] sm:$0xff]
    %v60 = vld [vmem:[%s1 + $0xc8] sm:$0xff]
    %v61 = vld [vmem:[%s1 + $0xd0] sm:$0xff]
    %v62 = vld [vmem:[%s1 + $0xd8] sm:$0xff]
    %v63 = vld [vmem:[%s1 + $0xe0] sm:$0xff]
    %v64 = vld [vmem:[%s1 + $0xe8] sm:$0xff]
    %v65 = vld [vmem:[%s1 + $0xf0] sm:$0xff]
    %v66 = vld [vmem:[%s1 + $0xf8] sm:$0xff]
    %v67 = vld [vmem:[%s2] sm:$0xff]
    %v68 = vld [vmem:[%s2 + $0x8] sm:$0xff]
    %v69 = vld [vmem:[%s2 + $0x10] sm:$0xff]
    %v70 = vld [vmem:[%s2 + $0x18] sm:$0xff]
    %v71 = vld [vmem:[%s2 + $0x20] sm:$0xff]
    %v72 = vld [vmem:[%s2 + $0x28] sm:$0xff]
    %v73 = vld [vmem:[%s2 + $0x30] sm:$0xff]
    %v74 = vld [vmem:[%s2 + $0x38] sm:$0xff]
    %v75 = vld [vmem:[%s2 + $0x40] sm:$0xff]
    %v76 = vld [vmem:[%s2 + $0x48] sm:$0xff]
    %v77 = vld [vmem:[%s2 + $0x50] sm:$0xff]
    %v78 = vld [vmem:[%s2 + $0x58] sm:$0xff]
    %v79 = vld [vmem:[%s2 + $0x60] sm:$0xff]
    %v80 = vld [vmem:[%s2 + $0x68] sm:$0xff]
    %v81 = vld [vmem:[%s2 + $0x70] sm:$0xff]
    %v82 = vld [vmem:[%s2 + $0x78] sm:$0xff]
    %v83 = vld [vmem:[%s2 + $0x80] sm:$0xff]
    %v84 = vld [vmem:[%s2 + $0x88] sm:$0xff]
    %v85 = vld [vmem:[%s2 + $0x90] sm:$0xff]
    %v86 = vld [vmem:[%s2 + $0x98] sm:$0xff]
    %v87 = vld [vmem:[%s2 + $0xa0] sm:$0xff]
    %v88 = vld [vmem:[%s2 + $0xa8] sm:$0xff]
    %v89 = vld [vmem:[%s2 + $0xb0] sm:$0xff]
    %v90 = vld [vmem:[%s2 + $0xb8] sm:$0xff]
    %v91 = vld [vmem:[%s2 + $0xc0] sm:$0xff]
    %v92 = vld [vmem:[%s2 + $0xc8] sm:$0xff]
    %v93 = vld [vmem:[%s2 + $0xd0] sm:$0xff]
    %v94 = vld [vmem:[%s2 + $0xd8] sm:$0xff]
    %v95 = vld [vmem:[%s2 + $0xe0] sm:$0xff]
    %v96 = vld [vmem:[%s2 + $0xe8] sm:$0xff]
    %v97 = vld [vmem:[%s2 + $0xf0] sm:$0xff]
    %v98 = vld [vmem:[%s2 + $0xf8] sm:$0xff]
    %99 = vmatprep.subr.mxu0 0.0
    %100 = vmatpush1.msra.mxu0 %v35
    %101 = vmatprep.subr.mxu0 0.0
    %102 = vmatpush1.msra.mxu0 %v36
    %103 = vmatprep.subr.mxu0 0.0
    %104 = vmatpush1.msra.mxu0 %v37
    %105 = vmatprep.subr.mxu0 0.0
    %106 = vmatpush1.msra.mxu0 %v38
    %107 = vmatprep.subr.mxu0 0.0
    %108 = vmatpush1.msra.mxu0 %v39
    %109 = vmatprep.subr.mxu0 0.0
    %110 = vmatpush1.msra.mxu0 %v40
    %111 = vmatprep.subr.mxu0 0.0
    %112 = vmatpush1.msra.mxu0 %v41
    %113 = vmatprep.subr.mxu0 0.0
    %114 = vmatpush1.msra.mxu0 %v42
    %115 = vmatprep.subr.mxu0 0.0
    %116 = vmatpush1.msra.mxu0 %v43
    %117 = vmatprep.subr.mxu0 0.0
    %118 = vmatpush1.msra.mxu0 %v44
    %119 = vmatprep.subr.mxu0 0.0
    %120 = vmatpush1.msra.mxu0 %v45
    %121 = vmatprep.subr.mxu0 0.0
    %122 = vmatpush1.msra.mxu0 %v46
    %123 = vmatprep.subr.mxu0 0.0
    %124 = vmatpush1.msra.mxu0 %v47
    %125 = vmatprep.subr.mxu0 0.0
    %126 = vmatpush1.msra.mxu0 %v48
    %127 = vmatprep.subr.mxu0 0.0
    %128 = vmatpush1.msra.mxu0 %v49
    %129 = vmatprep.subr.mxu0 0.0
    %130 = vmatpush1.msra.mxu0 %v50
    %131 = vmatprep.subr.mxu0 0.0
    %132 = vmatpush1.msra.mxu0 %v51
    %133 = vmatprep.subr.mxu0 0.0
    %134 = vmatpush1.msra.mxu0 %v52
    %135 = vmatprep.subr.mxu0 0.0
    %136 = vmatpush1.msra.mxu0 %v53
    %137 = vmatprep.subr.mxu0 0.0
    %138 = vmatpush1.msra.mxu0 %v54
    %139 = vmatprep.subr.mxu0 0.0
    %140 = vmatpush1.msra.mxu0 %v55
    %141 = vmatprep.subr.mxu0 0.0
    %142 = vmatpush1.msra.mxu0 %v56
    %143 = vmatprep.subr.mxu0 0.0
    %144 = vmatpush1.msra.mxu0 %v57
    %145 = vmatprep.subr.mxu0 0.0
    %146 = vmatpush1.msra.mxu0 %v58
    %147 = vmatprep.subr.mxu0 0.0
    %148 = vmatpush1.msra.mxu0 %v59
    %149 = vmatprep.subr.mxu0 0.0
    %150 = vmatpush1.msra.mxu0 %v60
    %151 = vmatprep.subr.mxu0 0.0
    %152 = vmatpush1.msra.mxu0 %v61
    %153 = vmatprep.subr.mxu0 0.0
    %154 = vmatpush1.msra.mxu0 %v62
    %155 = vmatprep.subr.mxu0 0.0
    %156 = vmatpush1.msra.mxu0 %v63
    %157 = vmatprep.subr.mxu0 0.0
    %158 = vmatpush1.msra.mxu0 %v64
    %159 = vmatprep.subr.mxu0 0.0
    %160 = vmatpush1.msra.mxu0 %v65
    %161 = vmatprep.subr.mxu0 0.0
    %162 = vmatpush1.msra.mxu0 %v66
    %163 = vmatprep.mubr.f32.mxu0 %v34
    %164 = vmatmul.mubr.f32.gmra.mrb[0].mxu0 %v33
    %v165 = vpop.f32.mrb[0].mxu0
    %v166 = vadd.f32 0.0, %v165
    %v167 = vpop.f32.mrb[0].mxu0
    %168 = vdwg.mxu0
    %v169 = vmul.f32 %v166, 0.0625
    %170 = vmatprep.subr.mxu0 0.0
    %171 = vmatpush1.msra.mxu0 %v67
    %172 = vmatprep.subr.mxu0 0.0
    %173 = vmatpush1.msra.mxu0 %v68
    %174 = vmatprep.subr.mxu0 0.0
    %175 = vmatpush1.msra.mxu0 %v69
    %176 = vmatprep.subr.mxu0 0.0
    %177 = vmatpush1.msra.mxu0 %v70
    %178 = vmatprep.subr.mxu0 0.0
    %179 = vmatpush1.msra.mxu0 %v71
    %180 = vmatprep.subr.mxu0 0.0
    %181 = vmatpush1.msra.mxu0 %v72
    %182 = vmatprep.subr.mxu0 0.0
    %183 = vmatpush1.msra.mxu0 %v73
    %184 = vmatprep.subr.mxu0 0.0
    %185 = vmatpush1.msra.mxu0 %v74
    %186 = vmatprep.subr.mxu0 0.0
    %187 = vmatpush1.msra.mxu0 %v75
    %188 = vmatprep.subr.mxu0 0.0
    %189 = vmatpush1.msra.mxu0 %v76
    %190 = vmatprep.subr.mxu0 0.0
    %191 = vmatpush1.msra.mxu0 %v77
    %192 = vmatprep.subr.mxu0 0.0
    %193 = vmatpush1.msra.mxu0 %v78
    %194 = vmatprep.subr.mxu0 0.0
    %195 = vmatpush1.msra.mxu0 %v79
    %196 = vmatprep.subr.mxu0 0.0
    %197 = vmatpush1.msra.mxu0 %v80
    %198 = vmatprep.subr.mxu0 0.0
    %199 = vmatpush1.msra.mxu0 %v81
    %200 = vmatprep.subr.mxu0 0.0
    %201 = vmatpush1.msra.mxu0 %v82
    %202 = vmatprep.subr.mxu0 0.0
    %203 = vmatpush1.msra.mxu0 %v83
    %204 = vmatprep.subr.mxu0 0.0
    %205 = vmatpush1.msra.mxu0 %v84
    %206 = vmatprep.subr.mxu0 0.0
    %207 = vmatpush1.msra.mxu0 %v85
    %208 = vmatprep.subr.mxu0 0.0
    %209 = vmatpush1.msra.mxu0 %v86
    %210 = vmatprep.subr.mxu0 0.0
    %211 = vmatpush1.msra.mxu0 %v87
    %212 = vmatprep.subr.mxu0 0.0
    %213 = vmatpush1.msra.mxu0 %v88
    %214 = vmatprep.subr.mxu0 0.0
    %215 = vmatpush1.msra.mxu0 %v89
    %216 = vmatprep.subr.mxu0 0.0
    %217 = vmatpush1.msra.mxu0 %v90
    %218 = vmatprep.subr.mxu0 0.0
    %219 = vmatpush1.msra.mxu0 %v91
    %220 = vmatprep.subr.mxu0 0.0
    %221 = vmatpush1.msra.mxu0 %v92
    %222 = vmatprep.subr.mxu0 0.0
    %223 = vmatpush1.msra.mxu0 %v93
    %224 = vmatprep.subr.mxu0 0.0
    %225 = vmatpush1.msra.mxu0 %v94
    %226 = vmatprep.subr.mxu0 0.0
    %227 = vmatpush1.msra.mxu0 %v95
    %228 = vmatprep.subr.mxu0 0.0
    %229 = vmatpush1.msra.mxu0 %v96
    %230 = vmatprep.subr.mxu0 0.0
    %231 = vmatpush1.msra.mxu0 %v97
    %232 = vmatprep.subr.mxu0 0.0
    %233 = vmatpush1.msra.mxu0 %v98
    %234 = vmatprep.mubr.f32.mxu0 %v34
    %235 = vmatmul.mubr.f32.gmra.mrb[0].mxu0 %v33
    %v236 = vpop.f32.mrb[0].mxu0
    %v237 = vadd.f32 0.0, %v236
    %v238 = vpop.f32.mrb[0].mxu0
    %239 = vdwg.mxu0
    %v240 = vmul.f32 %v237, 0.0625
    %v241 = vld [vmem:[%s3] sm:$0xff]
    %v242 = vld [vmem:[%s3 + $0x8] sm:$0xff]
    %v243 = vld [vmem:[%s4] sm:$0xff]
    %v244 = vld [vmem:[%s4 + $0x8] sm:$0xff]
    %v245 = vld [vmem:[%s5] sm:$0xff]
    %247 = vset.pattern.permute.xlu0 0
    %248 = vperm.xlu0 %247, %v243
    %v249 = vpop.permute.xlu0 %248
    %252 = vset.pattern.permute.xlu0 0
    %253 = vperm.xlu0 %252, %v244
    %v254 = vpop.permute.xlu0 %253
    %vm256 = vcmask 64512
    %v258 = vsel %vm256, %v241, 0
    %v261 = vsel %vm256, %v242, 0
    %263 = vmatprep.subr.mxu0 0.0
    %264 = vmatpush1.msra.mxu0 %v169
    %265 = vmatprep.subr.mxu0 0.0
    %266 = vmatpush1.msra.mxu0 0.0
    %267 = vmatprep.subr.mxu0 0.0
    %268 = vmatpush1.msra.mxu0 0.0
    %269 = vmatprep.subr.mxu0 0.0
    %270 = vmatpush1.msra.mxu0 0.0
    %271 = vmatprep.subr.mxu0 0.0
    %272 = vmatpush1.msra.mxu0 0.0
    %273 = vmatprep.subr.mxu0 0.0
    %274 = vmatpush1.msra.mxu0 0.0
    %275 = vmatprep.subr.mxu0 0.0
    %276 = vmatpush1.msra.mxu0 0.0
    %277 = vmatprep.subr.mxu0 0.0
    %278 = vmatpush1.msra.mxu0 0.0
    %279 = vmatprep.subr.mxu0 0.0
    %280 = vmatpush1.msra.mxu0 0.0
    %281 = vmatprep.subr.mxu0 0.0
    %282 = vmatpush1.msra.mxu0 0.0
    %283 = vmatprep.subr.mxu0 0.0
    %284 = vmatpush1.msra.mxu0 0.0
    %285 = vmatprep.subr.mxu0 0.0
    %286 = vmatpush1.msra.mxu0 0.0
    %287 = vmatprep.subr.mxu0 0.0
    %288 = vmatpush1.msra.mxu0 0.0
    %289 = vmatprep.subr.mxu0 0.0
    %290 = vmatpush1.msra.mxu0 0.0
    %291 = vmatprep.subr.mxu0 0.0
    %292 = vmatpush1.msra.mxu0 0.0
    %293 = vmatprep.subr.mxu0 0.0
    %294 = vmatpush1.msra.mxu0 0.0
    %295 = vmatprep.subr.mxu0 0.0
    %296 = vmatpush1.msra.mxu0 0.0
    %297 = vmatprep.subr.mxu0 0.0
    %298 = vmatpush1.msra.mxu0 0.0
    %299 = vmatprep.subr.mxu0 0.0
    %300 = vmatpush1.msra.mxu0 0.0
    %301 = vmatprep.subr.mxu0 0.0
    %302 = vmatpush1.msra.mxu0 0.0
    %303 = vmatprep.subr.mxu0 0.0
    %304 = vmatpush1.msra.mxu0 0.0
    %305 = vmatprep.subr.mxu0 0.0
    %306 = vmatpush1.msra.mxu0 0.0
    %307 = vmatprep.subr.mxu0 0.0
    %308 = vmatpush1.msra.mxu0 0.0
    %309 = vmatprep.subr.mxu0 0.0
    %310 = vmatpush1.msra.mxu0 0.0
    %311 = vmatprep.subr.mxu0 0.0
    %312 = vmatpush1.msra.mxu0 0.0
    %313 = vmatprep.subr.mxu0 0.0
    %314 = vmatpush1.msra.mxu0 0.0
    %315 = vmatprep.subr.mxu0 0.0
    %316 = vmatpush1.msra.mxu0 0.0
    %317 = vmatprep.subr.mxu0 0.0
    %318 = vmatpush1.msra.mxu0 0.0
    %319 = vmatprep.subr.mxu0 0.0
    %320 = vmatpush1.msra.mxu0 0.0
    %321 = vmatprep.subr.mxu0 0.0
    %322 = vmatpush1.msra.mxu0 0.0
    %323 = vmatprep.subr.mxu0 0.0
    %324 = vmatpush1.msra.mxu0 0.0
    %325 = vmatprep.subr.mxu0 0.0
    %326 = vmatpush1.msra.mxu0 0.0
    %327 = vmatprep.mubr.f32.mxu0 0.0
    %328 = vmatmul.mubr.f32.gmra.mrb[0].mxu0 %v258
    %v329 = vpop.f32.mrb[0].mxu0
    %v330 = vadd.f32 %v249, %v329
    %v331 = vpop.f32.mrb[0].mxu0
    %332 = vmatprep.mubr.f32.mxu0 0.0
    %333 = vmatmul.mubr.f32.gmra.mrb[0].mxu0 %v261
    %v334 = vpop.f32.mrb[0].mxu0
    %v335 = vadd.f32 %v254, %v334
    %v336 = vpop.f32.mrb[0].mxu0
    %337 = vdwg.mxu0
    %v338 = vadd.f32 %v330, 3.0
    %v339 = vadd.f32 %v335, 3.0
    %v340 = vmax.f32 %v338, 0.0
    %v341 = vmax.f32 %v339, 0.0
    %v342 = vmin.f32 %v340, 6.0
    %v343 = vmin.f32 %v341, 6.0
    %v344 = vmul.f32 %v342, 0.16666667
    %v345 = vmul.f32 %v343, 0.16666667
    %v346 = vmul.f32 %v330, %v344
    %v347 = vmul.f32 %v335, %v345
    %v348 = vld [vmem:[%s6] sm:$0xff]
    %350 = vset.pattern.permute.xlu0 0
    %351 = vperm.xlu0 %350, %v348
    %v352 = vpop.permute.xlu0 %351
    %vm354 = vcmask 130048
    %v356 = vsel %vm354, %v245, 0
    %358 = vmatprep.subr.mxu0 0.0
    %359 = vmatpush1.msra.mxu0 %v346
    %360 = vmatprep.subr.mxu0 0.0
    %361 = vmatpush1.msra.mxu0 %v347
    %362 = vmatprep.subr.mxu0 0.0
    %363 = vmatpush1.msra.mxu0 0.0
    %364 = vmatprep.subr.mxu0 0.0
    %365 = vmatpush1.msra.mxu0 0.0
    %366 = vmatprep.subr.mxu0 0.0
    %367 = vmatpush1.msra.mxu0 0.0
    %368 = vmatprep.subr.mxu0 0.0
    %369 = vmatpush1.msra.mxu0 0.0
    %370 = vmatprep.subr.mxu0 0.0
    %371 = vmatpush1.msra.mxu0 0.0
    %372 = vmatprep.subr.mxu0 0.0
    %373 = vmatpush1.msra.mxu0 0.0
    %374 = vmatprep.subr.mxu0 0.0
    %375 = vmatpush1.msra.mxu0 0.0
    %376 = vmatprep.subr.mxu0 0.0
    %377 = vmatpush1.msra.mxu0 0.0
    %378 = vmatprep.subr.mxu0 0.0
    %379 = vmatpush1.msra.mxu0 0.0
    %380 = vmatprep.subr.mxu0 0.0
    %381 = vmatpush1.msra.mxu0 0.0
    %382 = vmatprep.subr.mxu0 0.0
    %383 = vmatpush1.msra.mxu0 0.0
    %384 = vmatprep.subr.mxu0 0.0
    %385 = vmatpush1.msra.mxu0 0.0
    %386 = vmatprep.subr.mxu0 0.0
    %387 = vmatpush1.msra.mxu0 0.0
    %388 = vmatprep.subr.mxu0 0.0
    %389 = vmatpush1.msra.mxu0 0.0
    %390 = vmatprep.subr.mxu0 0.0
    %391 = vmatpush1.msra.mxu0 0.0
    %392 = vmatprep.subr.mxu0 0.0
    %393 = vmatpush1.msra.mxu0 0.0
    %394 = vmatprep.subr.mxu0 0.0
    %395 = vmatpush1.msra.mxu0 0.0
    %396 = vmatprep.subr.mxu0 0.0
    %397 = vmatpush1.msra.mxu0 0.0
    %398 = vmatprep.subr.mxu0 0.0
    %399 = vmatpush1.msra.mxu0 0.0
    %400 = vmatprep.subr.mxu0 0.0
    %401 = vmatpush1.msra.mxu0 0.0
    %402 = vmatprep.subr.mxu0 0.0
    %403 = vmatpush1.msra.mxu0 0.0
    %404 = vmatprep.subr.mxu0 0.0
    %405 = vmatpush1.msra.mxu0 0.0
    %406 = vmatprep.subr.mxu0 0.0
    %407 = vmatpush1.msra.mxu0 0.0
    %408 = vmatprep.subr.mxu0 0.0
    %409 = vmatpush1.msra.mxu0 0.0
    %410 = vmatprep.subr.mxu0 0.0
    %411 = vmatpush1.msra.mxu0 0.0
    %412 = vmatprep.subr.mxu0 0.0
    %413 = vmatpush1.msra.mxu0 0.0
    %414 = vmatprep.subr.mxu0 0.0
    %415 = vmatpush1.msra.mxu0 0.0
    %416 = vmatprep.subr.mxu0 0.0
    %417 = vmatpush1.msra.mxu0 0.0
    %418 = vmatprep.subr.mxu0 0.0
    %419 = vmatpush1.msra.mxu0 0.0
    %420 = vmatprep.subr.mxu0 0.0
    %421 = vmatpush1.msra.mxu0 0.0
    %422 = vmatprep.mubr.f32.mxu0 0.0
    %423 = vmatmul.mubr.f32.gmra.mrb[0].mxu0 %v356
    %v424 = vpop.f32.mrb[0].mxu0
    %v425 = vadd.f32 %v352, %v424
    %v426 = vpop.f32.mrb[0].mxu0
    %427 = vdwg.mxu0
    %v428 = vxor.u32 %v425, 2147483648
    %v429 = vmul.f32 %v428, 1.442695
    %v430 = vpow.pop %v429
    %v431 = vadd.f32 %v430, 1.0
    %v432 = vrcp.pop %v431
    %v433 = vmul.f32 1.0, %v432
    %v434 = vld [vmem:[%s7] sm:$0xff]
    %435 = vmatprep.subr.mxu0 0.0
    %436 = vmatpush1.msra.mxu0 %v240
    %437 = vmatprep.subr.mxu0 0.0
    %438 = vmatpush1.msra.mxu0 0.0
    %439 = vmatprep.subr.mxu0 0.0
    %440 = vmatpush1.msra.mxu0 0.0
    %441 = vmatprep.subr.mxu0 0.0
    %442 = vmatpush1.msra.mxu0 0.0
    %443 = vmatprep.subr.mxu0 0.0
    %444 = vmatpush1.msra.mxu0 0.0
    %445 = vmatprep.subr.mxu0 0.0
    %446 = vmatpush1.msra.mxu0 0.0
    %447 = vmatprep.subr.mxu0 0.0
    %448 = vmatpush1.msra.mxu0 0.0
    %449 = vmatprep.subr.mxu0 0.0
    %450 = vmatpush1.msra.mxu0 0.0
    %451 = vmatprep.subr.mxu0 0.0
    %452 = vmatpush1.msra.mxu0 0.0
    %453 = vmatprep.subr.mxu0 0.0
    %454 = vmatpush1.msra.mxu0 0.0
    %455 = vmatprep.subr.mxu0 0.0
    %456 = vmatpush1.msra.mxu0 0.0
    %457 = vmatprep.subr.mxu0 0.0
    %458 = vmatpush1.msra.mxu0 0.0
    %459 = vmatprep.subr.mxu0 0.0
    %460 = vmatpush1.msra.mxu0 0.0
    %461 = vmatprep.subr.mxu0 0.0
    %462 = vmatpush1.msra.mxu0 0.0
    %463 = vmatprep.subr.mxu0 0.0
    %464 = vmatpush1.msra.mxu0 0.0
    %465 = vmatprep.subr.mxu0 0.0
    %466 = vmatpush1.msra.mxu0 0.0
    %467 = vmatprep.subr.mxu0 0.0
    %468 = vmatpush1.msra.mxu0 0.0
    %469 = vmatprep.subr.mxu0 0.0
    %470 = vmatpush1.msra.mxu0 0.0
    %471 = vmatprep.subr.mxu0 0.0
    %472 = vmatpush1.msra.mxu0 0.0
    %473 = vmatprep.subr.mxu0 0.0
    %474 = vmatpush1.msra.mxu0 0.0
    %475 = vmatprep.subr.mxu0 0.0
    %476 = vmatpush1.msra.mxu0 0.0
    %477 = vmatprep.subr.mxu0 0.0
    %478 = vmatpush1.msra.mxu0 0.0
    %479 = vmatprep.subr.mxu0 0.0
    %480 = vmatpush1.msra.mxu0 0.0
    %481 = vmatprep.subr.mxu0 0.0
    %482 = vmatpush1.msra.mxu0 0.0
    %483 = vmatprep.subr.mxu0 0.0
    %484 = vmatpush1.msra.mxu0 0.0
    %485 = vmatprep.subr.mxu0 0.0
    %486 = vmatpush1.msra.mxu0 0.0
    %487 = vmatprep.subr.mxu0 0.0
    %488 = vmatpush1.msra.mxu0 0.0
    %489 = vmatprep.subr.mxu0 0.0
    %490 = vmatpush1.msra.mxu0 0.0
    %491 = vmatprep.subr.mxu0 0.0
    %492 = vmatpush1.msra.mxu0 0.0
    %493 = vmatprep.subr.mxu0 0.0
    %494 = vmatpush1.msra.mxu0 0.0
    %495 = vmatprep.subr.mxu0 0.0
    %496 = vmatpush1.msra.mxu0 0.0
    %497 = vmatprep.subr.mxu0 0.0
    %498 = vmatpush1.msra.mxu0 0.0
    %499 = vmatprep.mubr.f32.mxu0 0.0
    %500 = vmatmul.mubr.f32.gmra.mrb[0].mxu0 %v258
    %v501 = vpop.f32.mrb[0].mxu0
    %v502 = vadd.f32 %v249, %v501
    %v503 = vpop.f32.mrb[0].mxu0
    %504 = vmatprep.mubr.f32.mxu0 0.0
    %505 = vmatmul.mubr.f32.gmra.mrb[0].mxu0 %v261
    %v506 = vpop.f32.mrb[0].mxu0
    %v507 = vadd.f32 %v254, %v506
    %v508 = vpop.f32.mrb[0].mxu0
    %509 = vdwg.mxu0
    %v510 = vadd.f32 %v502, 3.0
    %v511 = vadd.f32 %v507, 3.0
    %v512 = vmax.f32 %v510, 0.0
    %v513 = vmax.f32 %v511, 0.0
    %v514 = vmin.f32 %v512, 6.0
    %v515 = vmin.f32 %v513, 6.0
    %v516 = vmul.f32 %v514, 0.16666667
    %v517 = vmul.f32 %v515, 0.16666667
    %v518 = vmul.f32 %v502, %v516
    %v519 = vmul.f32 %v507, %v517
    %v520 = vld [vmem:[%s8] sm:$0xff]
    %522 = vset.pattern.permute.xlu0 0
    %523 = vperm.xlu0 %522, %v520
    %v524 = vpop.permute.xlu0 %523
    %v527 = vsel %vm354, %v434, 0
    %529 = vmatprep.subr.mxu0 0.0
    %530 = vmatpush1.msra.mxu0 %v518
    %531 = vmatprep.subr.mxu0 0.0
    %532 = vmatpush1.msra.mxu0 %v519
    %533 = vmatprep.subr.mxu0 0.0
    %534 = vmatpush1.msra.mxu0 0.0
    %535 = vmatprep.subr.mxu0 0.0
    %536 = vmatpush1.msra.mxu0 0.0
    %537 = vmatprep.subr.mxu0 0.0
    %538 = vmatpush1.msra.mxu0 0.0
    %539 = vmatprep.subr.mxu0 0.0
    %540 = vmatpush1.msra.mxu0 0.0
    %541 = vmatprep.subr.mxu0 0.0
    %542 = vmatpush1.msra.mxu0 0.0
    %543 = vmatprep.subr.mxu0 0.0
    %544 = vmatpush1.msra.mxu0 0.0
    %545 = vmatprep.subr.mxu0 0.0
    %546 = vmatpush1.msra.mxu0 0.0
    %547 = vmatprep.subr.mxu0 0.0
    %548 = vmatpush1.msra.mxu0 0.0
    %549 = vmatprep.subr.mxu0 0.0
    %550 = vmatpush1.msra.mxu0 0.0
    %551 = vmatprep.subr.mxu0 0.0
    %552 = vmatpush1.msra.mxu0 0.0
    %553 = vmatprep.subr.mxu0 0.0
    %554 = vmatpush1.msra.mxu0 0.0
    %555 = vmatprep.subr.mxu0 0.0
    %556 = vmatpush1.msra.mxu0 0.0
    %557 = vmatprep.subr.mxu0 0.0
    %558 = vmatpush1.msra.mxu0 0.0
    %559 = vmatprep.subr.mxu0 0.0
    %560 = vmatpush1.msra.mxu0 0.0
    %561 = vmatprep.subr.mxu0 0.0
    %562 = vmatpush1.msra.mxu0 0.0
    %563 = vmatprep.subr.mxu0 0.0
    %564 = vmatpush1.msra.mxu0 0.0
    %565 = vmatprep.subr.mxu0 0.0
    %566 = vmatpush1.msra.mxu0 0.0
    %567 = vmatprep.subr.mxu0 0.0
    %568 = vmatpush1.msra.mxu0 0.0
    %569 = vmatprep.subr.mxu0 0.0
    %570 = vmatpush1.msra.mxu0 0.0
    %571 = vmatprep.subr.mxu0 0.0
    %572 = vmatpush1.msra.mxu0 0.0
    %573 = vmatprep.subr.mxu0 0.0
    %574 = vmatpush1.msra.mxu0 0.0
    %575 = vmatprep.subr.mxu0 0.0
    %576 = vmatpush1.msra.mxu0 0.0
    %577 = vmatprep.subr.mxu0 0.0
    %578 = vmatpush1.msra.mxu0 0.0
    %579 = vmatprep.subr.mxu0 0.0
    %580 = vmatpush1.msra.mxu0 0.0
    %581 = vmatprep.subr.mxu0 0.0
    %582 = vmatpush1.msra.mxu0 0.0
    %583 = vmatprep.subr.mxu0 0.0
    %584 = vmatpush1.msra.mxu0 0.0
    %585 = vmatprep.subr.mxu0 0.0
    %586 = vmatpush1.msra.mxu0 0.0
    %587 = vmatprep.subr.mxu0 0.0
    %588 = vmatpush1.msra.mxu0 0.0
    %589 = vmatprep.subr.mxu0 0.0
    %590 = vmatpush1.msra.mxu0 0.0
    %591 = vmatprep.subr.mxu0 0.0
    %592 = vmatpush1.msra.mxu0 0.0
    %593 = vmatprep.mubr.f32.mxu0 0.0
    %594 = vmatmul.mubr.f32.gmra.mrb[0].mxu0 %v527
    %v595 = vpop.f32.mrb[0].mxu0
    %v596 = vadd.f32 %v524, %v595
    %v597 = vpop.f32.mrb[0].mxu0
    %598 = vdwg.mxu0
    %v599 = vxor.u32 %v596, 2147483648
    %v600 = vmul.f32 %v599, 1.442695
    %v601 = vpow.pop %v600
    %v602 = vadd.f32 %v601, 1.0
    %v603 = vrcp.pop %v602
    %v604 = vmul.f32 1.0, %v603
    %v606 = vsel %vm354, %v433, 0
    %v609 = vsel %vm354, %v35, 0
    %v612 = vsel %vm354, %v36, 0
    %v615 = vsel %vm354, %v37, 0
    %v618 = vsel %vm354, %v38, 0
    %v621 = vsel %vm354, %v39, 0
    %v624 = vsel %vm354, %v40, 0
    %v627 = vsel %vm354, %v41, 0
    %v630 = vsel %vm354, %v42, 0
    %v633 = vsel %vm354, %v43, 0
    %v636 = vsel %vm354, %v44, 0
    %v639 = vsel %vm354, %v45, 0
    %v642 = vsel %vm354, %v46, 0
    %v645 = vsel %vm354, %v47, 0
    %v648 = vsel %vm354, %v48, 0
    %v651 = vsel %vm354, %v49, 0
    %v654 = vsel %vm354, %v50, 0
    %v657 = vsel %vm354, %v51, 0
    %v660 = vsel %vm354, %v52, 0
    %v663 = vsel %vm354, %v53, 0
    %v666 = vsel %vm354, %v54, 0
    %v669 = vsel %vm354, %v55, 0
    %v672 = vsel %vm354, %v56, 0
    %v675 = vsel %vm354, %v57, 0
    %v678 = vsel %vm354, %v58, 0
    %v681 = vsel %vm354, %v59, 0
    %v684 = vsel %vm354, %v60, 0
    %v687 = vsel %vm354, %v61, 0
    %v690 = vsel %vm354, %v62, 0
    %v693 = vsel %vm354, %v63, 0
    %v696 = vsel %vm354, %v64, 0
    %v699 = vsel %vm354, %v65, 0
    %v702 = vsel %vm354, %v66, 0
    %704 = vmatprep.subr.mxu0 0.0
    %705 = vmatpush1.xpose.msra.mxu0 %v609
    %706 = vmatprep.subr.mxu0 0.0
    %707 = vmatpush1.xpose.msra.mxu0 %v612
    %708 = vmatprep.subr.mxu0 0.0
    %709 = vmatpush1.xpose.msra.mxu0 %v615
    %710 = vmatprep.subr.mxu0 0.0
    %711 = vmatpush1.xpose.msra.mxu0 %v618
    %712 = vmatprep.subr.mxu0 0.0
    %713 = vmatpush1.xpose.msra.mxu0 %v621
    %714 = vmatprep.subr.mxu0 0.0
    %715 = vmatpush1.xpose.msra.mxu0 %v624
    %716 = vmatprep.subr.mxu0 0.0
    %717 = vmatpush1.xpose.msra.mxu0 %v627
    %718 = vmatprep.subr.mxu0 0.0
    %719 = vmatpush1.xpose.msra.mxu0 %v630
    %720 = vmatprep.subr.mxu0 0.0
    %721 = vmatpush1.xpose.msra.mxu0 %v633
    %722 = vmatprep.subr.mxu0 0.0
    %723 = vmatpush1.xpose.msra.mxu0 %v636
    %724 = vmatprep.subr.mxu0 0.0
    %725 = vmatpush1.xpose.msra.mxu0 %v639
    %726 = vmatprep.subr.mxu0 0.0
    %727 = vmatpush1.xpose.msra.mxu0 %v642
    %728 = vmatprep.subr.mxu0 0.0
    %729 = vmatpush1.xpose.msra.mxu0 %v645
    %730 = vmatprep.subr.mxu0 0.0
    %731 = vmatpush1.xpose.msra.mxu0 %v648
    %732 = vmatprep.subr.mxu0 0.0
    %733 = vmatpush1.xpose.msra.mxu0 %v651
    %734 = vmatprep.subr.mxu0 0.0
    %735 = vmatpush1.xpose.msra.mxu0 %v654
    %736 = vmatprep.subr.mxu0 0.0
    %737 = vmatpush1.xpose.msra.mxu0 %v657
    %738 = vmatprep.subr.mxu0 0.0
    %739 = vmatpush1.xpose.msra.mxu0 %v660
    %740 = vmatprep.subr.mxu0 0.0
    %741 = vmatpush1.xpose.msra.mxu0 %v663
    %742 = vmatprep.subr.mxu0 0.0
    %743 = vmatpush1.xpose.msra.mxu0 %v666
    %744 = vmatprep.subr.mxu0 0.0
    %745 = vmatpush1.xpose.msra.mxu0 %v669
    %746 = vmatprep.subr.mxu0 0.0
    %747 = vmatpush1.xpose.msra.mxu0 %v672
    %748 = vmatprep.subr.mxu0 0.0
    %749 = vmatpush1.xpose.msra.mxu0 %v675
    %750 = vmatprep.subr.mxu0 0.0
    %751 = vmatpush1.xpose.msra.mxu0 %v678
    %752 = vmatprep.subr.mxu0 0.0
    %753 = vmatpush1.xpose.msra.mxu0 %v681
    %754 = vmatprep.subr.mxu0 0.0
    %755 = vmatpush1.xpose.msra.mxu0 %v684
    %756 = vmatprep.subr.mxu0 0.0
    %757 = vmatpush1.xpose.msra.mxu0 %v687
    %758 = vmatprep.subr.mxu0 0.0
    %759 = vmatpush1.xpose.msra.mxu0 %v690
    %760 = vmatprep.subr.mxu0 0.0
    %761 = vmatpush1.xpose.msra.mxu0 %v693
    %762 = vmatprep.subr.mxu0 0.0
    %763 = vmatpush1.xpose.msra.mxu0 %v696
    %764 = vmatprep.subr.mxu0 0.0
    %765 = vmatpush1.xpose.msra.mxu0 %v699
    %766 = vmatprep.subr.mxu0 0.0
    %767 = vmatpush1.xpose.msra.mxu0 %v702
    %768 = vmatprep.mubr.f32.mxu0 0.0
    %769 = vmatmul.mubr.f32.gmra.mrb[0].mxu0 %v606
    %v770 = vpop.f32.mrb[0].mxu0
    %v771 = vadd.f32 0.0, %v770
    %v772 = vpop.f32.mrb[0].mxu0
    %v773 = vadd.f32 0.0, %v772
    %774 = vdwg.mxu0
    %v775 = vmul.f32 %v33, %v771
    %v776 = vmul.f32 %v34, %v773
    %v778 = vsel %vm354, %v604, 0
    %v781 = vsel %vm354, %v67, 0
    %v784 = vsel %vm354, %v68, 0
    %v787 = vsel %vm354, %v69, 0
    %v790 = vsel %vm354, %v70, 0
    %v793 = vsel %vm354, %v71, 0
    %v796 = vsel %vm354, %v72, 0
    %v799 = vsel %vm354, %v73, 0
    %v802 = vsel %vm354, %v74, 0
    %v805 = vsel %vm354, %v75, 0
    %v808 = vsel %vm354, %v76, 0
    %v811 = vsel %vm354, %v77, 0
    %v814 = vsel %vm354, %v78, 0
    %v817 = vsel %vm354, %v79, 0
    %v820 = vsel %vm354, %v80, 0
    %v823 = vsel %vm354, %v81, 0
    %v826 = vsel %vm354, %v82, 0
    %v829 = vsel %vm354, %v83, 0
    %v832 = vsel %vm354, %v84, 0
    %v835 = vsel %vm354, %v85, 0
    %v838 = vsel %vm354, %v86, 0
    %v841 = vsel %vm354, %v87, 0
    %v844 = vsel %vm354, %v88, 0
    %v847 = vsel %vm354, %v89, 0
    %v850 = vsel %vm354, %v90, 0
    %v853 = vsel %vm354, %v91, 0
    %v856 = vsel %vm354, %v92, 0
    %v859 = vsel %vm354, %v93, 0
    %v862 = vsel %vm354, %v94, 0
    %v865 = vsel %vm354, %v95, 0
    %v868 = vsel %vm354, %v96, 0
    %v871 = vsel %vm354, %v97, 0
    %v874 = vsel %vm354, %v98, 0
    %876 = vmatprep.subr.mxu0 0.0
    %877 = vmatpush1.xpose.msra.mxu0 %v781
    %878 = vmatprep.subr.mxu0 0.0
    %879 = vmatpush1.xpose.msra.mxu0 %v784
    %880 = vmatprep.subr.mxu0 0.0
    %881 = vmatpush1.xpose.msra.mxu0 %v787
    %882 = vmatprep.subr.mxu0 0.0
    %883 = vmatpush1.xpose.msra.mxu0 %v790
    %884 = vmatprep.subr.mxu0 0.0
    %885 = vmatpush1.xpose.msra.mxu0 %v793
    %886 = vmatprep.subr.mxu0 0.0
    %887 = vmatpush1.xpose.msra.mxu0 %v796
    %888 = vmatprep.subr.mxu0 0.0
    %889 = vmatpush1.xpose.msra.mxu0 %v799
    %890 = vmatprep.subr.mxu0 0.0
    %891 = vmatpush1.xpose.msra.mxu0 %v802
    %892 = vmatprep.subr.mxu0 0.0
    %893 = vmatpush1.xpose.msra.mxu0 %v805
    %894 = vmatprep.subr.mxu0 0.0
    %895 = vmatpush1.xpose.msra.mxu0 %v808
    %896 = vmatprep.subr.mxu0 0.0
    %897 = vmatpush1.xpose.msra.mxu0 %v811
    %898 = vmatprep.subr.mxu0 0.0
    %899 = vmatpush1.xpose.msra.mxu0 %v814
    %900 = vmatprep.subr.mxu0 0.0
    %901 = vmatpush1.xpose.msra.mxu0 %v817
    %902 = vmatprep.subr.mxu0 0.0
    %903 = vmatpush1.xpose.msra.mxu0 %v820
    %904 = vmatprep.subr.mxu0 0.0
    %905 = vmatpush1.xpose.msra.mxu0 %v823
    %906 = vmatprep.subr.mxu0 0.0
    %907 = vmatpush1.xpose.msra.mxu0 %v826
    %908 = vmatprep.subr.mxu0 0.0
    %909 = vmatpush1.xpose.msra.mxu0 %v829
    %910 = vmatprep.subr.mxu0 0.0
    %911 = vmatpush1.xpose.msra.mxu0 %v832
    %912 = vmatprep.subr.mxu0 0.0
    %913 = vmatpush1.xpose.msra.mxu0 %v835
    %914 = vmatprep.subr.mxu0 0.0
    %915 = vmatpush1.xpose.msra.mxu0 %v838
    %916 = vmatprep.subr.mxu0 0.0
    %917 = vmatpush1.xpose.msra.mxu0 %v841
    %918 = vmatprep.subr.mxu0 0.0
    %919 = vmatpush1.xpose.msra.mxu0 %v844
    %920 = vmatprep.subr.mxu0 0.0
    %921 = vmatpush1.xpose.msra.mxu0 %v847
    %922 = vmatprep.subr.mxu0 0.0
    %923 = vmatpush1.xpose.msra.mxu0 %v850
    %924 = vmatprep.subr.mxu0 0.0
    %925 = vmatpush1.xpose.msra.mxu0 %v853
    %926 = vmatprep.subr.mxu0 0.0
    %927 = vmatpush1.xpose.msra.mxu0 %v856
    %928 = vmatprep.subr.mxu0 0.0
    %929 = vmatpush1.xpose.msra.mxu0 %v859
    %930 = vmatprep.subr.mxu0 0.0
    %931 = vmatpush1.xpose.msra.mxu0 %v862
    %932 = vmatprep.subr.mxu0 0.0
    %933 = vmatpush1.xpose.msra.mxu0 %v865
    %934 = vmatprep.subr.mxu0 0.0
    %935 = vmatpush1.xpose.msra.mxu0 %v868
    %936 = vmatprep.subr.mxu0 0.0
    %937 = vmatpush1.xpose.msra.mxu0 %v871
    %938 = vmatprep.subr.mxu0 0.0
    %939 = vmatpush1.xpose.msra.mxu0 %v874
    %940 = vmatprep.mubr.f32.mxu0 0.0
    %941 = vmatmul.mubr.f32.gmra.mrb[0].mxu0 %v778
    %v942 = vpop.f32.mrb[0].mxu0
    %v943 = vadd.f32 0.0, %v942
    %v944 = vpop.f32.mrb[0].mxu0
    %v945 = vadd.f32 0.0, %v944
    %946 = vdwg.mxu0
    %v947 = vmul.f32 %v775, %v943
    %v948 = vmul.f32 %v776, %v945
    %949 = vst [vmem:[#allocation2] sm:$0xff] %v947
    %950 = vst [vmem:[#allocation2 + $0x8] sm:$0xff] %v948
    // Predicated region
    $region38: #{tpu_custom_call.1} parent=1 // pred_check
      _
    $region39: #{tpu_custom_call.1} parent=1 // pred_check_branch
      %952 = sbr.rel (0) target = $region41
    $region40: #{tpu_custom_call.1} parent=1 // pred_region
      %s954 = ssub.s32 256, 256
      %955 = vsyncadd [#allocation3], %s954
      %s957 = sshll.u32 [#allocation2], 4
      %s958 = int_to_ptr.vmem [resolvable:$true] %s957
      %960 = dma.vmem_to_hbm [thread:$0]  %s958, 256, %s9, [#allocation3]
    $region41: #{tpu_custom_call.1} parent=1 // pred_fallthru
      _
    // Predicated region
    $region42: #{tpu_custom_call.1} parent=1 // pred_check
      _
    $region43: #{tpu_custom_call.1} parent=1 // pred_check_branch
      %962 = sbr.rel (0) target = $region45
    $region44: #{tpu_custom_call.1} parent=1 // pred_region
      %963 = dma.done [#allocation3], 256
    $region45: #{tpu_custom_call.1} parent=1 // pred_fallthru
      _
    %964 = vsyncpa [#allocation3], 1

// kernel: tpu_custom_call.1
$region0: #{tpu_custom_call.1}
  #allocation0 [shape = 'u32[]', space=smem, size = 0x4, offset = 0x4, fixed_abs, tag = 'smem constant byte address 0x4 - core index']
  #allocation1 [shape = 'u32[144,128]{1,0:T(1,128)}', space=vmem, size = 0x12000, scoped, tag = 'internal scratch']
  %s0 = inlined_call_operand.vmem [shape: f32[8,256], index: 0, kind: input, shape index: {}]
  %s1 = inlined_call_operand.vmem [shape: f32[256,16], index: 1, kind: input, shape index: {}]
  %s2 = inlined_call_operand.vmem [shape: f32[256,16], index: 2, kind: input, shape index: {}]
  %s3 = inlined_call_operand.vmem [shape: f32[16,8], index: 3, kind: input, shape index: {}]
  %s4 = inlined_call_operand.vmem [shape: f32[16,1], index: 4, kind: input, shape index: {}]
  %s5 = inlined_call_operand.vmem [shape: f32[8,16], index: 5, kind: input, shape index: {}]
  %s6 = inlined_call_operand.vmem [shape: f32[8,1], index: 6, kind: input, shape index: {}]
  %s7 = inlined_call_operand.vmem [shape: f32[8,16], index: 7, kind: input, shape index: {}]
  %s8 = inlined_call_operand.vmem [shape: f32[8,1], index: 8, kind: input, shape index: {}]
  %s9 = inlined_call_operand.hbm [shape: f32[8,256], index: 9, kind: output, shape index: {}]
  %s10 = sld [smem:[#allocation0]]
  $region46: #{tpu_custom_call.1} parent=0
    _
  %s12 = ssub.s32 1, %s10
  %s13 = scalar_select 0, %s12, %s10
  $region1: #{tpu_custom_call.1} parent=0
    #allocation2 [shape = 'u8[8192]{0}', space=vmem, size = 0x2000, scoped, tag = 'output window, operand 0, single buffered']
    #allocation3 [shape = 's32[1]{0}', space=sflag, size = 0x4, scoped, tag = 'scoped memory for tpu_custom_call.1']
    %14 = vsyncpa [#allocation3], 0
    // Predicated region
    $region2: #{tpu_custom_call.1} parent=1 // pred_check
      _
    $region3: #{tpu_custom_call.1} parent=1 // pred_check_branch
      %16 = sbr.rel (0) target = $region5
    $region4: #{tpu_custom_call.1} parent=1 // pred_region
      _
    $region5: #{tpu_custom_call.1} parent=1 // pred_fallthru
      _
    // Predicated region
    $region6: #{tpu_custom_call.1} parent=1 // pred_check
      _
    $region7: #{tpu_custom_call.1} parent=1 // pred_check_branch
      %18 = sbr.rel (0) target = $region9
    $region8: #{tpu_custom_call.1} parent=1 // pred_region
      _
    $region9: #{tpu_custom_call.1} parent=1 // pred_fallthru
      _
    // Predicated region
    $region10: #{tpu_custom_call.1} parent=1 // pred_check
      _
    $region11: #{tpu_custom_call.1} parent=1 // pred_check_branch
      %20 = sbr.rel (0) target = $region13
    $region12: #{tpu_custom_call.1} parent=1 // pred_region
      _
    $region13: #{tpu_custom_call.1} parent=1 // pred_fallthru
      _
    // Predicated region
    $region14: #{tpu_custom_call.1} parent=1 // pred_check
      _
    $region15: #{tpu_custom_call.1} parent=1 // pred_check_branch
      %22 = sbr.rel (0) target = $region17
    $region16: #{tpu_custom_call.1} parent=1 // pred_region
      _
    $region17: #{tpu_custom_call.1} parent=1 // pred_fallthru
      _
    // Predicated region
    $region18: #{tpu_custom_call.1} parent=1 // pred_check
      _
    $region19: #{tpu_custom_call.1} parent=1 // pred_check_branch
      %24 = sbr.rel (0) target = $region21
    $region20: #{tpu_custom_call.1} parent=1 // pred_region
      _
    $region21: #{tpu_custom_call.1} parent=1 // pred_fallthru
      _
    // Predicated region
    $region22: #{tpu_custom_call.1} parent=1 // pred_check
      _
    $region23: #{tpu_custom_call.1} parent=1 // pred_check_branch
      %26 = sbr.rel (0) target = $region25
    $region24: #{tpu_custom_call.1} parent=1 // pred_region
      _
    $region25: #{tpu_custom_call.1} parent=1 // pred_fallthru
      _
    // Predicated region
    $region26: #{tpu_custom_call.1} parent=1 // pred_check
      _
    $region27: #{tpu_custom_call.1} parent=1 // pred_check_branch
      %28 = sbr.rel (0) target = $region29
    $region28: #{tpu_custom_call.1} parent=1 // pred_region
      _
    $region29: #{tpu_custom_call.1} parent=1 // pred_fallthru
      _
    // Predicated region
    $region30: #{tpu_custom_call.1} parent=1 // pred_check
      _
    $region31: #{tpu_custom_call.1} parent=1 // pred_check_branch
      %30 = sbr.rel (0) target = $region33
    $region32: #{tpu_custom_call.1} parent=1 // pred_region
      _
    $region33: #{tpu_custom_call.1} parent=1 // pred_fallthru
      _
    // Predicated region
    $region34: #{tpu_custom_call.1} parent=1 // pred_check
      _
    $region35: #{tpu_custom_call.1} parent=1 // pred_check_branch
      %32 = sbr.rel (0) target = $region37
    $region36: #{tpu_custom_call.1} parent=1 // pred_region
      _
    $region37: #{tpu_custom_call.1} parent=1 // pred_fallthru
      _
    %v33 = vld [vmem:[%s0] sm:$0xff]
    %v34 = vld [vmem:[%s0 + $0x8] sm:$0xff]
    %v35 = vld [vmem:[%s1] sm:$0xff]
    %v36 = vld [vmem:[%s1 + $0x8] sm:$0xff]
    %v37 = vld [vmem:[%s1 + $0x10] sm:$0xff]
    %v38 = vld [vmem:[%s1 + $0x18] sm:$0xff]
    %v39 = vld [vmem:[%s1 + $0x20] sm:$0xff]
    %v40 = vld [vmem:[%s1 + $0x28] sm:$0xff]
    %v41 = vld [vmem:[%s1 + $0x30] sm:$0xff]
    %v42 = vld [vmem:[%s1 + $0x38] sm:$0xff]
    %v43 = vld [vmem:[%s1 + $0x40] sm:$0xff]
    %v44 = vld [vmem:[%s1 + $0x48] sm:$0xff]
    %v45 = vld [vmem:[%s1 + $0x50] sm:$0xff]
    %v46 = vld [vmem:[%s1 + $0x58] sm:$0xff]
    %v47 = vld [vmem:[%s1 + $0x60] sm:$0xff]
    %v48 = vld [vmem:[%s1 + $0x68] sm:$0xff]
    %v49 = vld [vmem:[%s1 + $0x70] sm:$0xff]
    %v50 = vld [vmem:[%s1 + $0x78] sm:$0xff]
    %v51 = vld [vmem:[%s1 + $0x80] sm:$0xff]
    %v52 = vld [vmem:[%s1 + $0x88] sm:$0xff]
    %v53 = vld [vmem:[%s1 + $0x90] sm:$0xff]
    %v54 = vld [vmem:[%s1 + $0x98] sm:$0xff]
    %v55 = vld [vmem:[%s1 + $0xa0] sm:$0xff]
    %v56 = vld [vmem:[%s1 + $0xa8] sm:$0xff]
    %v57 = vld [vmem:[%s1 + $0xb0] sm:$0xff]
    %v58 = vld [vmem:[%s1 + $0xb8] sm:$0xff]
    %v59 = vld [vmem:[%s1 + $0xc0] sm:$0xff]
    %v60 = vld [vmem:[%s1 + $0xc8] sm:$0xff]
    %v61 = vld [vmem:[%s1 + $0xd0] sm:$0xff]
    %v62 = vld [vmem:[%s1 + $0xd8] sm:$0xff]
    %v63 = vld [vmem:[%s1 + $0xe0] sm:$0xff]
    %v64 = vld [vmem:[%s1 + $0xe8] sm:$0xff]
    %v65 = vld [vmem:[%s1 + $0xf0] sm:$0xff]
    %v66 = vld [vmem:[%s1 + $0xf8] sm:$0xff]
    %v67 = vld [vmem:[%s2] sm:$0xff]
    %v68 = vld [vmem:[%s2 + $0x8] sm:$0xff]
    %v69 = vld [vmem:[%s2 + $0x10] sm:$0xff]
    %v70 = vld [vmem:[%s2 + $0x18] sm:$0xff]
    %v71 = vld [vmem:[%s2 + $0x20] sm:$0xff]
    %v72 = vld [vmem:[%s2 + $0x28] sm:$0xff]
    %v73 = vld [vmem:[%s2 + $0x30] sm:$0xff]
    %v74 = vld [vmem:[%s2 + $0x38] sm:$0xff]
    %v75 = vld [vmem:[%s2 + $0x40] sm:$0xff]
    %v76 = vld [vmem:[%s2 + $0x48] sm:$0xff]
    %v77 = vld [vmem:[%s2 + $0x50] sm:$0xff]
    %v78 = vld [vmem:[%s2 + $0x58] sm:$0xff]
    %v79 = vld [vmem:[%s2 + $0x60] sm:$0xff]
    %v80 = vld [vmem:[%s2 + $0x68] sm:$0xff]
    %v81 = vld [vmem:[%s2 + $0x70] sm:$0xff]
    %v82 = vld [vmem:[%s2 + $0x78] sm:$0xff]
    %v83 = vld [vmem:[%s2 + $0x80] sm:$0xff]
    %v84 = vld [vmem:[%s2 + $0x88] sm:$0xff]
    %v85 = vld [vmem:[%s2 + $0x90] sm:$0xff]
    %v86 = vld [vmem:[%s2 + $0x98] sm:$0xff]
    %v87 = vld [vmem:[%s2 + $0xa0] sm:$0xff]
    %v88 = vld [vmem:[%s2 + $0xa8] sm:$0xff]
    %v89 = vld [vmem:[%s2 + $0xb0] sm:$0xff]
    %v90 = vld [vmem:[%s2 + $0xb8] sm:$0xff]
    %v91 = vld [vmem:[%s2 + $0xc0] sm:$0xff]
    %v92 = vld [vmem:[%s2 + $0xc8] sm:$0xff]
    %v93 = vld [vmem:[%s2 + $0xd0] sm:$0xff]
    %v94 = vld [vmem:[%s2 + $0xd8] sm:$0xff]
    %v95 = vld [vmem:[%s2 + $0xe0] sm:$0xff]
    %v96 = vld [vmem:[%s2 + $0xe8] sm:$0xff]
    %v97 = vld [vmem:[%s2 + $0xf0] sm:$0xff]
    %v98 = vld [vmem:[%s2 + $0xf8] sm:$0xff]
    %99 = vmatprep.subr.mxu0 0.0
    %100 = vmatpush1.msra.mxu0 %v35
    %101 = vmatprep.subr.mxu0 0.0
    %102 = vmatpush1.msra.mxu0 %v36
    %103 = vmatprep.subr.mxu0 0.0
    %104 = vmatpush1.msra.mxu0 %v37
    %105 = vmatprep.subr.mxu0 0.0
    %106 = vmatpush1.msra.mxu0 %v38
    %107 = vmatprep.subr.mxu0 0.0
    %108 = vmatpush1.msra.mxu0 %v39
    %109 = vmatprep.subr.mxu0 0.0
    %110 = vmatpush1.msra.mxu0 %v40
    %111 = vmatprep.subr.mxu0 0.0
    %112 = vmatpush1.msra.mxu0 %v41
    %113 = vmatprep.subr.mxu0 0.0
    %114 = vmatpush1.msra.mxu0 %v42
    %115 = vmatprep.subr.mxu0 0.0
    %116 = vmatpush1.msra.mxu0 %v43
    %117 = vmatprep.subr.mxu0 0.0
    %118 = vmatpush1.msra.mxu0 %v44
    %119 = vmatprep.subr.mxu0 0.0
    %120 = vmatpush1.msra.mxu0 %v45
    %121 = vmatprep.subr.mxu0 0.0
    %122 = vmatpush1.msra.mxu0 %v46
    %123 = vmatprep.subr.mxu0 0.0
    %124 = vmatpush1.msra.mxu0 %v47
    %125 = vmatprep.subr.mxu0 0.0
    %126 = vmatpush1.msra.mxu0 %v48
    %127 = vmatprep.subr.mxu0 0.0
    %128 = vmatpush1.msra.mxu0 %v49
    %129 = vmatprep.subr.mxu0 0.0
    %130 = vmatpush1.msra.mxu0 %v50
    %131 = vmatprep.subr.mxu0 0.0
    %132 = vmatpush1.msra.mxu0 %v51
    %133 = vmatprep.subr.mxu0 0.0
    %134 = vmatpush1.msra.mxu0 %v52
    %135 = vmatprep.subr.mxu0 0.0
    %136 = vmatpush1.msra.mxu0 %v53
    %137 = vmatprep.subr.mxu0 0.0
    %138 = vmatpush1.msra.mxu0 %v54
    %139 = vmatprep.subr.mxu0 0.0
    %140 = vmatpush1.msra.mxu0 %v55
    %141 = vmatprep.subr.mxu0 0.0
    %142 = vmatpush1.msra.mxu0 %v56
    %143 = vmatprep.subr.mxu0 0.0
    %144 = vmatpush1.msra.mxu0 %v57
    %145 = vmatprep.subr.mxu0 0.0
    %146 = vmatpush1.msra.mxu0 %v58
    %147 = vmatprep.subr.mxu0 0.0
    %148 = vmatpush1.msra.mxu0 %v59
    %149 = vmatprep.subr.mxu0 0.0
    %150 = vmatpush1.msra.mxu0 %v60
    %151 = vmatprep.subr.mxu0 0.0
    %152 = vmatpush1.msra.mxu0 %v61
    %153 = vmatprep.subr.mxu0 0.0
    %154 = vmatpush1.msra.mxu0 %v62
    %155 = vmatprep.subr.mxu0 0.0
    %156 = vmatpush1.msra.mxu0 %v63
    %157 = vmatprep.subr.mxu0 0.0
    %158 = vmatpush1.msra.mxu0 %v64
    %159 = vmatprep.subr.mxu0 0.0
    %160 = vmatpush1.msra.mxu0 %v65
    %161 = vmatprep.subr.mxu0 0.0
    %162 = vmatpush1.msra.mxu0 %v66
    %163 = vmatprep.mubr.f32.mxu0 %v34
    %164 = vmatmul.mubr.f32.gmra.mrb[0].mxu0 %v33
    %v165 = vpop.f32.mrb[0].mxu0
    %v166 = vadd.f32 0.0, %v165
    %v167 = vpop.f32.mrb[0].mxu0
    %168 = vdwg.mxu0
    %v169 = vmul.f32 %v166, 0.0625
    %170 = vmatprep.subr.mxu0 0.0
    %171 = vmatpush1.msra.mxu0 %v67
    %172 = vmatprep.subr.mxu0 0.0
    %173 = vmatpush1.msra.mxu0 %v68
    %174 = vmatprep.subr.mxu0 0.0
    %175 = vmatpush1.msra.mxu0 %v69
    %176 = vmatprep.subr.mxu0 0.0
    %177 = vmatpush1.msra.mxu0 %v70
    %178 = vmatprep.subr.mxu0 0.0
    %179 = vmatpush1.msra.mxu0 %v71
    %180 = vmatprep.subr.mxu0 0.0
    %181 = vmatpush1.msra.mxu0 %v72
    %182 = vmatprep.subr.mxu0 0.0
    %183 = vmatpush1.msra.mxu0 %v73
    %184 = vmatprep.subr.mxu0 0.0
    %185 = vmatpush1.msra.mxu0 %v74
    %186 = vmatprep.subr.mxu0 0.0
    %187 = vmatpush1.msra.mxu0 %v75
    %188 = vmatprep.subr.mxu0 0.0
    %189 = vmatpush1.msra.mxu0 %v76
    %190 = vmatprep.subr.mxu0 0.0
    %191 = vmatpush1.msra.mxu0 %v77
    %192 = vmatprep.subr.mxu0 0.0
    %193 = vmatpush1.msra.mxu0 %v78
    %194 = vmatprep.subr.mxu0 0.0
    %195 = vmatpush1.msra.mxu0 %v79
    %196 = vmatprep.subr.mxu0 0.0
    %197 = vmatpush1.msra.mxu0 %v80
    %198 = vmatprep.subr.mxu0 0.0
    %199 = vmatpush1.msra.mxu0 %v81
    %200 = vmatprep.subr.mxu0 0.0
    %201 = vmatpush1.msra.mxu0 %v82
    %202 = vmatprep.subr.mxu0 0.0
    %203 = vmatpush1.msra.mxu0 %v83
    %204 = vmatprep.subr.mxu0 0.0
    %205 = vmatpush1.msra.mxu0 %v84
    %206 = vmatprep.subr.mxu0 0.0
    %207 = vmatpush1.msra.mxu0 %v85
    %208 = vmatprep.subr.mxu0 0.0
    %209 = vmatpush1.msra.mxu0 %v86
    %210 = vmatprep.subr.mxu0 0.0
    %211 = vmatpush1.msra.mxu0 %v87
    %212 = vmatprep.subr.mxu0 0.0
    %213 = vmatpush1.msra.mxu0 %v88
    %214 = vmatprep.subr.mxu0 0.0
    %215 = vmatpush1.msra.mxu0 %v89
    %216 = vmatprep.subr.mxu0 0.0
    %217 = vmatpush1.msra.mxu0 %v90
    %218 = vmatprep.subr.mxu0 0.0
    %219 = vmatpush1.msra.mxu0 %v91
    %220 = vmatprep.subr.mxu0 0.0
    %221 = vmatpush1.msra.mxu0 %v92
    %222 = vmatprep.subr.mxu0 0.0
    %223 = vmatpush1.msra.mxu0 %v93
    %224 = vmatprep.subr.mxu0 0.0
    %225 = vmatpush1.msra.mxu0 %v94
    %226 = vmatprep.subr.mxu0 0.0
    %227 = vmatpush1.msra.mxu0 %v95
    %228 = vmatprep.subr.mxu0 0.0
    %229 = vmatpush1.msra.mxu0 %v96
    %230 = vmatprep.subr.mxu0 0.0
    %231 = vmatpush1.msra.mxu0 %v97
    %232 = vmatprep.subr.mxu0 0.0
    %233 = vmatpush1.msra.mxu0 %v98
    %234 = vmatprep.mubr.f32.mxu0 %v34
    %235 = vmatmul.mubr.f32.gmra.mrb[0].mxu0 %v33
    %v236 = vpop.f32.mrb[0].mxu0
    %v237 = vadd.f32 0.0, %v236
    %v238 = vpop.f32.mrb[0].mxu0
    %239 = vdwg.mxu0
    %v240 = vmul.f32 %v237, 0.0625
    %v241 = vld [vmem:[%s3] sm:$0xff]
    %v242 = vld [vmem:[%s3 + $0x8] sm:$0xff]
    %v243 = vld [vmem:[%s4] sm:$0xff]
    %v244 = vld [vmem:[%s4 + $0x8] sm:$0xff]
    %v245 = vld [vmem:[%s5] sm:$0xff]
    %247 = vset.pattern.permute.xlu0 0
    %248 = vperm.xlu0 %247, %v243
    %v249 = vpop.permute.xlu0 %248
    %252 = vset.pattern.permute.xlu0 0
    %253 = vperm.xlu0 %252, %v244
    %v254 = vpop.permute.xlu0 %253
    %vm256 = vcmask 64512
    %v258 = vsel %vm256, %v241, 0
    %v261 = vsel %vm256, %v242, 0
    %263 = vmatprep.subr.mxu0 0.0
    %264 = vmatpush1.msra.mxu0 %v169
    %265 = vmatprep.subr.mxu0 0.0
    %266 = vmatpush1.msra.mxu0 0.0
    %267 = vmatprep.subr.mxu0 0.0
    %268 = vmatpush1.msra.mxu0 0.0
    %269 = vmatprep.subr.mxu0 0.0
    %270 = vmatpush1.msra.mxu0 0.0
    %271 = vmatprep.subr.mxu0 0.0
    %272 = vmatpush1.msra.mxu0 0.0
    %273 = vmatprep.subr.mxu0 0.0
    %274 = vmatpush1.msra.mxu0 0.0
    %275 = vmatprep.subr.mxu0 0.0
    %276 = vmatpush1.msra.mxu0 0.0
    %277 = vmatprep.subr.mxu0 0.0
    %278 = vmatpush1.msra.mxu0 0.0
    %279 = vmatprep.subr.mxu0 0.0
    %280 = vmatpush1.msra.mxu0 0.0
    %281 = vmatprep.subr.mxu0 0.0
    %282 = vmatpush1.msra.mxu0 0.0
    %283 = vmatprep.subr.mxu0 0.0
    %284 = vmatpush1.msra.mxu0 0.0
    %285 = vmatprep.subr.mxu0 0.0
    %286 = vmatpush1.msra.mxu0 0.0
    %287 = vmatprep.subr.mxu0 0.0
    %288 = vmatpush1.msra.mxu0 0.0
    %289 = vmatprep.subr.mxu0 0.0
    %290 = vmatpush1.msra.mxu0 0.0
    %291 = vmatprep.subr.mxu0 0.0
    %292 = vmatpush1.msra.mxu0 0.0
    %293 = vmatprep.subr.mxu0 0.0
    %294 = vmatpush1.msra.mxu0 0.0
    %295 = vmatprep.subr.mxu0 0.0
    %296 = vmatpush1.msra.mxu0 0.0
    %297 = vmatprep.subr.mxu0 0.0
    %298 = vmatpush1.msra.mxu0 0.0
    %299 = vmatprep.subr.mxu0 0.0
    %300 = vmatpush1.msra.mxu0 0.0
    %301 = vmatprep.subr.mxu0 0.0
    %302 = vmatpush1.msra.mxu0 0.0
    %303 = vmatprep.subr.mxu0 0.0
    %304 = vmatpush1.msra.mxu0 0.0
    %305 = vmatprep.subr.mxu0 0.0
    %306 = vmatpush1.msra.mxu0 0.0
    %307 = vmatprep.subr.mxu0 0.0
    %308 = vmatpush1.msra.mxu0 0.0
    %309 = vmatprep.subr.mxu0 0.0
    %310 = vmatpush1.msra.mxu0 0.0
    %311 = vmatprep.subr.mxu0 0.0
    %312 = vmatpush1.msra.mxu0 0.0
    %313 = vmatprep.subr.mxu0 0.0
    %314 = vmatpush1.msra.mxu0 0.0
    %315 = vmatprep.subr.mxu0 0.0
    %316 = vmatpush1.msra.mxu0 0.0
    %317 = vmatprep.subr.mxu0 0.0
    %318 = vmatpush1.msra.mxu0 0.0
    %319 = vmatprep.subr.mxu0 0.0
    %320 = vmatpush1.msra.mxu0 0.0
    %321 = vmatprep.subr.mxu0 0.0
    %322 = vmatpush1.msra.mxu0 0.0
    %323 = vmatprep.subr.mxu0 0.0
    %324 = vmatpush1.msra.mxu0 0.0
    %325 = vmatprep.subr.mxu0 0.0
    %326 = vmatpush1.msra.mxu0 0.0
    %327 = vmatprep.mubr.f32.mxu0 0.0
    %328 = vmatmul.mubr.f32.gmra.mrb[0].mxu0 %v258
    %v329 = vpop.f32.mrb[0].mxu0
    %v330 = vadd.f32 %v249, %v329
    %v331 = vpop.f32.mrb[0].mxu0
    %332 = vmatprep.mubr.f32.mxu0 0.0
    %333 = vmatmul.mubr.f32.gmra.mrb[0].mxu0 %v261
    %v334 = vpop.f32.mrb[0].mxu0
    %v335 = vadd.f32 %v254, %v334
    %v336 = vpop.f32.mrb[0].mxu0
    %337 = vdwg.mxu0
    %v338 = vadd.f32 %v330, 3.0
    %v339 = vadd.f32 %v335, 3.0
    %v340 = vmax.f32 %v338, 0.0
    %v341 = vmax.f32 %v339, 0.0
    %v342 = vmin.f32 %v340, 6.0
    %v343 = vmin.f32 %v341, 6.0
    %v344 = vmul.f32 %v342, 0.16666667
    %v345 = vmul.f32 %v343, 0.16666667
    %v346 = vmul.f32 %v330, %v344
    %v347 = vmul.f32 %v335, %v345
    %v348 = vld [vmem:[%s6] sm:$0xff]
    %350 = vset.pattern.permute.xlu0 0
    %351 = vperm.xlu0 %350, %v348
    %v352 = vpop.permute.xlu0 %351
    %vm354 = vcmask 130048
    %v356 = vsel %vm354, %v245, 0
    %358 = vmatprep.subr.mxu0 0.0
    %359 = vmatpush1.msra.mxu0 %v346
    %360 = vmatprep.subr.mxu0 0.0
    %361 = vmatpush1.msra.mxu0 %v347
    %362 = vmatprep.subr.mxu0 0.0
    %363 = vmatpush1.msra.mxu0 0.0
    %364 = vmatprep.subr.mxu0 0.0
    %365 = vmatpush1.msra.mxu0 0.0
    %366 = vmatprep.subr.mxu0 0.0
    %367 = vmatpush1.msra.mxu0 0.0
    %368 = vmatprep.subr.mxu0 0.0
    %369 = vmatpush1.msra.mxu0 0.0
    %370 = vmatprep.subr.mxu0 0.0
    %371 = vmatpush1.msra.mxu0 0.0
    %372 = vmatprep.subr.mxu0 0.0
    %373 = vmatpush1.msra.mxu0 0.0
    %374 = vmatprep.subr.mxu0 0.0
    %375 = vmatpush1.msra.mxu0 0.0
    %376 = vmatprep.subr.mxu0 0.0
    %377 = vmatpush1.msra.mxu0 0.0
    %378 = vmatprep.subr.mxu0 0.0
    %379 = vmatpush1.msra.mxu0 0.0
    %380 = vmatprep.subr.mxu0 0.0
    %381 = vmatpush1.msra.mxu0 0.0
    %382 = vmatprep.subr.mxu0 0.0
    %383 = vmatpush1.msra.mxu0 0.0
    %384 = vmatprep.subr.mxu0 0.0
    %385 = vmatpush1.msra.mxu0 0.0
    %386 = vmatprep.subr.mxu0 0.0
    %387 = vmatpush1.msra.mxu0 0.0
    %388 = vmatprep.subr.mxu0 0.0
    %389 = vmatpush1.msra.mxu0 0.0
    %390 = vmatprep.subr.mxu0 0.0
    %391 = vmatpush1.msra.mxu0 0.0
    %392 = vmatprep.subr.mxu0 0.0
    %393 = vmatpush1.msra.mxu0 0.0
    %394 = vmatprep.subr.mxu0 0.0
    %395 = vmatpush1.msra.mxu0 0.0
    %396 = vmatprep.subr.mxu0 0.0
    %397 = vmatpush1.msra.mxu0 0.0
    %398 = vmatprep.subr.mxu0 0.0
    %399 = vmatpush1.msra.mxu0 0.0
    %400 = vmatprep.subr.mxu0 0.0
    %401 = vmatpush1.msra.mxu0 0.0
    %402 = vmatprep.subr.mxu0 0.0
    %403 = vmatpush1.msra.mxu0 0.0
    %404 = vmatprep.subr.mxu0 0.0
    %405 = vmatpush1.msra.mxu0 0.0
    %406 = vmatprep.subr.mxu0 0.0
    %407 = vmatpush1.msra.mxu0 0.0
    %408 = vmatprep.subr.mxu0 0.0
    %409 = vmatpush1.msra.mxu0 0.0
    %410 = vmatprep.subr.mxu0 0.0
    %411 = vmatpush1.msra.mxu0 0.0
    %412 = vmatprep.subr.mxu0 0.0
    %413 = vmatpush1.msra.mxu0 0.0
    %414 = vmatprep.subr.mxu0 0.0
    %415 = vmatpush1.msra.mxu0 0.0
    %416 = vmatprep.subr.mxu0 0.0
    %417 = vmatpush1.msra.mxu0 0.0
    %418 = vmatprep.subr.mxu0 0.0
    %419 = vmatpush1.msra.mxu0 0.0
    %420 = vmatprep.subr.mxu0 0.0
    %421 = vmatpush1.msra.mxu0 0.0
    %422 = vmatprep.mubr.f32.mxu0 0.0
    %423 = vmatmul.mubr.f32.gmra.mrb[0].mxu0 %v356
    %v424 = vpop.f32.mrb[0].mxu0
    %v425 = vadd.f32 %v352, %v424
    %v426 = vpop.f32.mrb[0].mxu0
    %427 = vdwg.mxu0
    %v428 = vxor.u32 %v425, 2147483648
    %v429 = vmul.f32 %v428, 1.442695
    %v430 = vpow.pop %v429
    %v431 = vadd.f32 %v430, 1.0
    %v432 = vrcp.pop %v431
    %v433 = vmul.f32 1.0, %v432
    %v434 = vld [vmem:[%s7] sm:$0xff]
    %435 = vmatprep.subr.mxu0 0.0
    %436 = vmatpush1.msra.mxu0 %v240
    %437 = vmatprep.subr.mxu0 0.0
    %438 = vmatpush1.msra.mxu0 0.0
    %439 = vmatprep.subr.mxu0 0.0
    %440 = vmatpush1.msra.mxu0 0.0
    %441 = vmatprep.subr.mxu0 0.0
    %442 = vmatpush1.msra.mxu0 0.0
    %443 = vmatprep.subr.mxu0 0.0
    %444 = vmatpush1.msra.mxu0 0.0
    %445 = vmatprep.subr.mxu0 0.0
    %446 = vmatpush1.msra.mxu0 0.0
    %447 = vmatprep.subr.mxu0 0.0
    %448 = vmatpush1.msra.mxu0 0.0
    %449 = vmatprep.subr.mxu0 0.0
    %450 = vmatpush1.msra.mxu0 0.0
    %451 = vmatprep.subr.mxu0 0.0
    %452 = vmatpush1.msra.mxu0 0.0
    %453 = vmatprep.subr.mxu0 0.0
    %454 = vmatpush1.msra.mxu0 0.0
    %455 = vmatprep.subr.mxu0 0.0
    %456 = vmatpush1.msra.mxu0 0.0
    %457 = vmatprep.subr.mxu0 0.0
    %458 = vmatpush1.msra.mxu0 0.0
    %459 = vmatprep.subr.mxu0 0.0
    %460 = vmatpush1.msra.mxu0 0.0
    %461 = vmatprep.subr.mxu0 0.0
    %462 = vmatpush1.msra.mxu0 0.0
    %463 = vmatprep.subr.mxu0 0.0
    %464 = vmatpush1.msra.mxu0 0.0
    %465 = vmatprep.subr.mxu0 0.0
    %466 = vmatpush1.msra.mxu0 0.0
    %467 = vmatprep.subr.mxu0 0.0
    %468 = vmatpush1.msra.mxu0 0.0
    %469 = vmatprep.subr.mxu0 0.0
    %470 = vmatpush1.msra.mxu0 0.0
    %471 = vmatprep.subr.mxu0 0.0
    %472 = vmatpush1.msra.mxu0 0.0
    %473 = vmatprep.subr.mxu0 0.0
    %474 = vmatpush1.msra.mxu0 0.0
    %475 = vmatprep.subr.mxu0 0.0
    %476 = vmatpush1.msra.mxu0 0.0
    %477 = vmatprep.subr.mxu0 0.0
    %478 = vmatpush1.msra.mxu0 0.0
    %479 = vmatprep.subr.mxu0 0.0
    %480 = vmatpush1.msra.mxu0 0.0
    %481 = vmatprep.subr.mxu0 0.0
    %482 = vmatpush1.msra.mxu0 0.0
    %483 = vmatprep.subr.mxu0 0.0
    %484 = vmatpush1.msra.mxu0 0.0
    %485 = vmatprep.subr.mxu0 0.0
    %486 = vmatpush1.msra.mxu0 0.0
    %487 = vmatprep.subr.mxu0 0.0
    %488 = vmatpush1.msra.mxu0 0.0
    %489 = vmatprep.subr.mxu0 0.0
    %490 = vmatpush1.msra.mxu0 0.0
    %491 = vmatprep.subr.mxu0 0.0
    %492 = vmatpush1.msra.mxu0 0.0
    %493 = vmatprep.subr.mxu0 0.0
    %494 = vmatpush1.msra.mxu0 0.0
    %495 = vmatprep.subr.mxu0 0.0
    %496 = vmatpush1.msra.mxu0 0.0
    %497 = vmatprep.subr.mxu0 0.0
    %498 = vmatpush1.msra.mxu0 0.0
    %499 = vmatprep.mubr.f32.mxu0 0.0
    %500 = vmatmul.mubr.f32.gmra.mrb[0].mxu0 %v258
    %v501 = vpop.f32.mrb[0].mxu0
    %v502 = vadd.f32 %v249, %v501
    %v503 = vpop.f32.mrb[0].mxu0
    %504 = vmatprep.mubr.f32.mxu0 0.0
    %505 = vmatmul.mubr.f32.gmra.mrb[0].mxu0 %v261
    %v506 = vpop.f32.mrb[0].mxu0
    %v507 = vadd.f32 %v254, %v506
    %v508 = vpop.f32.mrb[0].mxu0
    %509 = vdwg.mxu0
    %v510 = vadd.f32 %v502, 3.0
    %v511 = vadd.f32 %v507, 3.0
    %v512 = vmax.f32 %v510, 0.0
    %v513 = vmax.f32 %v511, 0.0
    %v514 = vmin.f32 %v512, 6.0
    %v515 = vmin.f32 %v513, 6.0
    %v516 = vmul.f32 %v514, 0.16666667
    %v517 = vmul.f32 %v515, 0.16666667
    %v518 = vmul.f32 %v502, %v516
    %v519 = vmul.f32 %v507, %v517
    %v520 = vld [vmem:[%s8] sm:$0xff]
    %522 = vset.pattern.permute.xlu0 0
    %523 = vperm.xlu0 %522, %v520
    %v524 = vpop.permute.xlu0 %523
    %v527 = vsel %vm354, %v434, 0
    %529 = vmatprep.subr.mxu0 0.0
    %530 = vmatpush1.msra.mxu0 %v518
    %531 = vmatprep.subr.mxu0 0.0
    %532 = vmatpush1.msra.mxu0 %v519
    %533 = vmatprep.subr.mxu0 0.0
    %534 = vmatpush1.msra.mxu0 0.0
    %535 = vmatprep.subr.mxu0 0.0
    %536 = vmatpush1.msra.mxu0 0.0
    %537 = vmatprep.subr.mxu0 0.0
    %538 = vmatpush1.msra.mxu0 0.0
    %539 = vmatprep.subr.mxu0 0.0
    %540 = vmatpush1.msra.mxu0 0.0
    %541 = vmatprep.subr.mxu0 0.0
    %542 = vmatpush1.msra.mxu0 0.0
    %543 = vmatprep.subr.mxu0 0.0
    %544 = vmatpush1.msra.mxu0 0.0
    %545 = vmatprep.subr.mxu0 0.0
    %546 = vmatpush1.msra.mxu0 0.0
    %547 = vmatprep.subr.mxu0 0.0
    %548 = vmatpush1.msra.mxu0 0.0
    %549 = vmatprep.subr.mxu0 0.0
    %550 = vmatpush1.msra.mxu0 0.0
    %551 = vmatprep.subr.mxu0 0.0
    %552 = vmatpush1.msra.mxu0 0.0
    %553 = vmatprep.subr.mxu0 0.0
    %554 = vmatpush1.msra.mxu0 0.0
    %555 = vmatprep.subr.mxu0 0.0
    %556 = vmatpush1.msra.mxu0 0.0
    %557 = vmatprep.subr.mxu0 0.0
    %558 = vmatpush1.msra.mxu0 0.0
    %559 = vmatprep.subr.mxu0 0.0
    %560 = vmatpush1.msra.mxu0 0.0
    %561 = vmatprep.subr.mxu0 0.0
    %562 = vmatpush1.msra.mxu0 0.0
    %563 = vmatprep.subr.mxu0 0.0
    %564 = vmatpush1.msra.mxu0 0.0
    %565 = vmatprep.subr.mxu0 0.0
    %566 = vmatpush1.msra.mxu0 0.0
    %567 = vmatprep.subr.mxu0 0.0
    %568 = vmatpush1.msra.mxu0 0.0
    %569 = vmatprep.subr.mxu0 0.0
    %570 = vmatpush1.msra.mxu0 0.0
    %571 = vmatprep.subr.mxu0 0.0
    %572 = vmatpush1.msra.mxu0 0.0
    %573 = vmatprep.subr.mxu0 0.0
    %574 = vmatpush1.msra.mxu0 0.0
    %575 = vmatprep.subr.mxu0 0.0
    %576 = vmatpush1.msra.mxu0 0.0
    %577 = vmatprep.subr.mxu0 0.0
    %578 = vmatpush1.msra.mxu0 0.0
    %579 = vmatprep.subr.mxu0 0.0
    %580 = vmatpush1.msra.mxu0 0.0
    %581 = vmatprep.subr.mxu0 0.0
    %582 = vmatpush1.msra.mxu0 0.0
    %583 = vmatprep.subr.mxu0 0.0
    %584 = vmatpush1.msra.mxu0 0.0
    %585 = vmatprep.subr.mxu0 0.0
    %586 = vmatpush1.msra.mxu0 0.0
    %587 = vmatprep.subr.mxu0 0.0
    %588 = vmatpush1.msra.mxu0 0.0
    %589 = vmatprep.subr.mxu0 0.0
    %590 = vmatpush1.msra.mxu0 0.0
    %591 = vmatprep.subr.mxu0 0.0
    %592 = vmatpush1.msra.mxu0 0.0
    %593 = vmatprep.mubr.f32.mxu0 0.0
    %594 = vmatmul.mubr.f32.gmra.mrb[0].mxu0 %v527
    %v595 = vpop.f32.mrb[0].mxu0
    %v596 = vadd.f32 %v524, %v595
    %v597 = vpop.f32.mrb[0].mxu0
    %598 = vdwg.mxu0
    %v599 = vxor.u32 %v596, 2147483648
    %v600 = vmul.f32 %v599, 1.442695
    %v601 = vpow.pop %v600
    %v602 = vadd.f32 %v601, 1.0
    %v603 = vrcp.pop %v602
    %v604 = vmul.f32 1.0, %v603
    %v606 = vsel %vm354, %v433, 0
    %v609 = vsel %vm354, %v35, 0
    %v612 = vsel %vm354, %v36, 0
    %v615 = vsel %vm354, %v37, 0
    %v618 = vsel %vm354, %v38, 0
    %v621 = vsel %vm354, %v39, 0
    %v624 = vsel %vm354, %v40, 0
    %v627 = vsel %vm354, %v41, 0
    %v630 = vsel %vm354, %v42, 0
    %v633 = vsel %vm354, %v43, 0
    %v636 = vsel %vm354, %v44, 0
    %v639 = vsel %vm354, %v45, 0
    %v642 = vsel %vm354, %v46, 0
    %v645 = vsel %vm354, %v47, 0
    %v648 = vsel %vm354, %v48, 0
    %v651 = vsel %vm354, %v49, 0
    %v654 = vsel %vm354, %v50, 0
    %v657 = vsel %vm354, %v51, 0
    %v660 = vsel %vm354, %v52, 0
    %v663 = vsel %vm354, %v53, 0
    %v666 = vsel %vm354, %v54, 0
    %v669 = vsel %vm354, %v55, 0
    %v672 = vsel %vm354, %v56, 0
    %v675 = vsel %vm354, %v57, 0
    %v678 = vsel %vm354, %v58, 0
    %v681 = vsel %vm354, %v59, 0
    %v684 = vsel %vm354, %v60, 0
    %v687 = vsel %vm354, %v61, 0
    %v690 = vsel %vm354, %v62, 0
    %v693 = vsel %vm354, %v63, 0
    %v696 = vsel %vm354, %v64, 0
    %v699 = vsel %vm354, %v65, 0
    %v702 = vsel %vm354, %v66, 0
    %704 = vmatprep.subr.mxu0 0.0
    %705 = vmatpush1.xpose.msra.mxu0 %v609
    %706 = vmatprep.subr.mxu0 0.0
    %707 = vmatpush1.xpose.msra.mxu0 %v612
    %708 = vmatprep.subr.mxu0 0.0
    %709 = vmatpush1.xpose.msra.mxu0 %v615
    %710 = vmatprep.subr.mxu0 0.0
    %711 = vmatpush1.xpose.msra.mxu0 %v618
    %712 = vmatprep.subr.mxu0 0.0
    %713 = vmatpush1.xpose.msra.mxu0 %v621
    %714 = vmatprep.subr.mxu0 0.0
    %715 = vmatpush1.xpose.msra.mxu0 %v624
    %716 = vmatprep.subr.mxu0 0.0
    %717 = vmatpush1.xpose.msra.mxu0 %v627
    %718 = vmatprep.subr.mxu0 0.0
    %719 = vmatpush1.xpose.msra.mxu0 %v630
    %720 = vmatprep.subr.mxu0 0.0
    %721 = vmatpush1.xpose.msra.mxu0 %v633
    %722 = vmatprep.subr.mxu0 0.0
    %723 = vmatpush1.xpose.msra.mxu0 %v636
    %724 = vmatprep.subr.mxu0 0.0
    %725 = vmatpush1.xpose.msra.mxu0 %v639
    %726 = vmatprep.subr.mxu0 0.0
    %727 = vmatpush1.xpose.msra.mxu0 %v642
    %728 = vmatprep.subr.mxu0 0.0
    %729 = vmatpush1.xpose.msra.mxu0 %v645
    %730 = vmatprep.subr.mxu0 0.0
    %731 = vmatpush1.xpose.msra.mxu0 %v648
    %732 = vmatprep.subr.mxu0 0.0
    %733 = vmatpush1.xpose.msra.mxu0 %v651
    %734 = vmatprep.subr.mxu0 0.0
    %735 = vmatpush1.xpose.msra.mxu0 %v654
    %736 = vmatprep.subr.mxu0 0.0
    %737 = vmatpush1.xpose.msra.mxu0 %v657
    %738 = vmatprep.subr.mxu0 0.0
    %739 = vmatpush1.xpose.msra.mxu0 %v660
    %740 = vmatprep.subr.mxu0 0.0
    %741 = vmatpush1.xpose.msra.mxu0 %v663
    %742 = vmatprep.subr.mxu0 0.0
    %743 = vmatpush1.xpose.msra.mxu0 %v666
    %744 = vmatprep.subr.mxu0 0.0
    %745 = vmatpush1.xpose.msra.mxu0 %v669
    %746 = vmatprep.subr.mxu0 0.0
    %747 = vmatpush1.xpose.msra.mxu0 %v672
    %748 = vmatprep.subr.mxu0 0.0
    %749 = vmatpush1.xpose.msra.mxu0 %v675
    %750 = vmatprep.subr.mxu0 0.0
    %751 = vmatpush1.xpose.msra.mxu0 %v678
    %752 = vmatprep.subr.mxu0 0.0
    %753 = vmatpush1.xpose.msra.mxu0 %v681
    %754 = vmatprep.subr.mxu0 0.0
    %755 = vmatpush1.xpose.msra.mxu0 %v684
    %756 = vmatprep.subr.mxu0 0.0
    %757 = vmatpush1.xpose.msra.mxu0 %v687
    %758 = vmatprep.subr.mxu0 0.0
    %759 = vmatpush1.xpose.msra.mxu0 %v690
    %760 = vmatprep.subr.mxu0 0.0
    %761 = vmatpush1.xpose.msra.mxu0 %v693
    %762 = vmatprep.subr.mxu0 0.0
    %763 = vmatpush1.xpose.msra.mxu0 %v696
    %764 = vmatprep.subr.mxu0 0.0
    %765 = vmatpush1.xpose.msra.mxu0 %v699
    %766 = vmatprep.subr.mxu0 0.0
    %767 = vmatpush1.xpose.msra.mxu0 %v702
    %768 = vmatprep.mubr.f32.mxu0 0.0
    %769 = vmatmul.mubr.f32.gmra.mrb[0].mxu0 %v606
    %v770 = vpop.f32.mrb[0].mxu0
    %v771 = vadd.f32 0.0, %v770
    %v772 = vpop.f32.mrb[0].mxu0
    %v773 = vadd.f32 0.0, %v772
    %774 = vdwg.mxu0
    %v775 = vmul.f32 %v33, %v771
    %v776 = vmul.f32 %v34, %v773
    %v778 = vsel %vm354, %v604, 0
    %v781 = vsel %vm354, %v67, 0
    %v784 = vsel %vm354, %v68, 0
    %v787 = vsel %vm354, %v69, 0
    %v790 = vsel %vm354, %v70, 0
    %v793 = vsel %vm354, %v71, 0
    %v796 = vsel %vm354, %v72, 0
    %v799 = vsel %vm354, %v73, 0
    %v802 = vsel %vm354, %v74, 0
    %v805 = vsel %vm354, %v75, 0
    %v808 = vsel %vm354, %v76, 0
    %v811 = vsel %vm354, %v77, 0
    %v814 = vsel %vm354, %v78, 0
    %v817 = vsel %vm354, %v79, 0
    %v820 = vsel %vm354, %v80, 0
    %v823 = vsel %vm354, %v81, 0
    %v826 = vsel %vm354, %v82, 0
    %v829 = vsel %vm354, %v83, 0
    %v832 = vsel %vm354, %v84, 0
    %v835 = vsel %vm354, %v85, 0
    %v838 = vsel %vm354, %v86, 0
    %v841 = vsel %vm354, %v87, 0
    %v844 = vsel %vm354, %v88, 0
    %v847 = vsel %vm354, %v89, 0
    %v850 = vsel %vm354, %v90, 0
    %v853 = vsel %vm354, %v91, 0
    %v856 = vsel %vm354, %v92, 0
    %v859 = vsel %vm354, %v93, 0
    %v862 = vsel %vm354, %v94, 0
    %v865 = vsel %vm354, %v95, 0
    %v868 = vsel %vm354, %v96, 0
    %v871 = vsel %vm354, %v97, 0
    %v874 = vsel %vm354, %v98, 0
    %876 = vmatprep.subr.mxu0 0.0
    %877 = vmatpush1.xpose.msra.mxu0 %v781
    %878 = vmatprep.subr.mxu0 0.0
    %879 = vmatpush1.xpose.msra.mxu0 %v784
    %880 = vmatprep.subr.mxu0 0.0
    %881 = vmatpush1.xpose.msra.mxu0 %v787
    %882 = vmatprep.subr.mxu0 0.0
    %883 = vmatpush1.xpose.msra.mxu0 %v790
    %884 = vmatprep.subr.mxu0 0.0
    %885 = vmatpush1.xpose.msra.mxu0 %v793
    %886 = vmatprep.subr.mxu0 0.0
    %887 = vmatpush1.xpose.msra.mxu0 %v796
    %888 = vmatprep.subr.mxu0 0.0
    %889 = vmatpush1.xpose.msra.mxu0 %v799
    %890 = vmatprep.subr.mxu0 0.0
    %891 = vmatpush1.xpose.msra.mxu0 %v802
    %892 = vmatprep.subr.mxu0 0.0
    %893 = vmatpush1.xpose.msra.mxu0 %v805
    %894 = vmatprep.subr.mxu0 0.0
    %895 = vmatpush1.xpose.msra.mxu0 %v808
    %896 = vmatprep.subr.mxu0 0.0
    %897 = vmatpush1.xpose.msra.mxu0 %v811
    %898 = vmatprep.subr.mxu0 0.0
    %899 = vmatpush1.xpose.msra.mxu0 %v814
    %900 = vmatprep.subr.mxu0 0.0
    %901 = vmatpush1.xpose.msra.mxu0 %v817
    %902 = vmatprep.subr.mxu0 0.0
    %903 = vmatpush1.xpose.msra.mxu0 %v820
    %904 = vmatprep.subr.mxu0 0.0
    %905 = vmatpush1.xpose.msra.mxu0 %v823
    %906 = vmatprep.subr.mxu0 0.0
    %907 = vmatpush1.xpose.msra.mxu0 %v826
    %908 = vmatprep.subr.mxu0 0.0
    %909 = vmatpush1.xpose.msra.mxu0 %v829
    %910 = vmatprep.subr.mxu0 0.0
    %911 = vmatpush1.xpose.msra.mxu0 %v832
    %912 = vmatprep.subr.mxu0 0.0
    %913 = vmatpush1.xpose.msra.mxu0 %v835
    %914 = vmatprep.subr.mxu0 0.0
    %915 = vmatpush1.xpose.msra.mxu0 %v838
    %916 = vmatprep.subr.mxu0 0.0
    %917 = vmatpush1.xpose.msra.mxu0 %v841
    %918 = vmatprep.subr.mxu0 0.0
    %919 = vmatpush1.xpose.msra.mxu0 %v844
    %920 = vmatprep.subr.mxu0 0.0
    %921 = vmatpush1.xpose.msra.mxu0 %v847
    %922 = vmatprep.subr.mxu0 0.0
    %923 = vmatpush1.xpose.msra.mxu0 %v850
    %924 = vmatprep.subr.mxu0 0.0
    %925 = vmatpush1.xpose.msra.mxu0 %v853
    %926 = vmatprep.subr.mxu0 0.0
    %927 = vmatpush1.xpose.msra.mxu0 %v856
    %928 = vmatprep.subr.mxu0 0.0
    %929 = vmatpush1.xpose.msra.mxu0 %v859
    %930 = vmatprep.subr.mxu0 0.0
    %931 = vmatpush1.xpose.msra.mxu0 %v862
    %932 = vmatprep.subr.mxu0 0.0
    %933 = vmatpush1.xpose.msra.mxu0 %v865
    %934 = vmatprep.subr.mxu0 0.0
    %935 = vmatpush1.xpose.msra.mxu0 %v868
    %936 = vmatprep.subr.mxu0 0.0
    %937 = vmatpush1.xpose.msra.mxu0 %v871
    %938 = vmatprep.subr.mxu0 0.0
    %939 = vmatpush1.xpose.msra.mxu0 %v874
    %940 = vmatprep.mubr.f32.mxu0 0.0
    %941 = vmatmul.mubr.f32.gmra.mrb[0].mxu0 %v778
    %v942 = vpop.f32.mrb[0].mxu0
    %v943 = vadd.f32 0.0, %v942
    %v944 = vpop.f32.mrb[0].mxu0
    %v945 = vadd.f32 0.0, %v944
    %946 = vdwg.mxu0
    %v947 = vmul.f32 %v775, %v943
    %v948 = vmul.f32 %v776, %v945
    %949 = vst [vmem:[#allocation2] sm:$0xff] %v947
    %950 = vst [vmem:[#allocation2 + $0x8] sm:$0xff] %v948
    // Predicated region
    $region38: #{tpu_custom_call.1} parent=1 // pred_check
      _
    $region39: #{tpu_custom_call.1} parent=1 // pred_check_branch
      %952 = sbr.rel (0) target = $region41
    $region40: #{tpu_custom_call.1} parent=1 // pred_region
      %s954 = ssub.s32 256, 256
      %955 = vsyncadd [#allocation3], %s954
      %s957 = sshll.u32 [#allocation2], 4
      %s958 = int_to_ptr.vmem [resolvable:$true] %s957
      %960 = dma.vmem_to_hbm [thread:$0]  %s958, 256, %s9, [#allocation3]
    $region41: #{tpu_custom_call.1} parent=1 // pred_fallthru
      _
    // Predicated region
    $region42: #{tpu_custom_call.1} parent=1 // pred_check
      _
    $region43: #{tpu_custom_call.1} parent=1 // pred_check_branch
      %962 = sbr.rel (0) target = $region45
    $region44: #{tpu_custom_call.1} parent=1 // pred_region
      %963 = dma.done [#allocation3], 256
    $region45: #{tpu_custom_call.1} parent=1 // pred_fallthru
      _
    %964 = vsyncpa [#allocation3], 1

</llo_original>
